<compile_context>
chip_gen: v7x
topology: tpu7x:2x2x1
jax: 0.10.0
libtpu: 0.0.40
codegen_flags: <defaults>
</compile_context>

<pallas_src>
import jax
import jax.numpy as jnp
from jax.experimental import pallas as pl
from jax.experimental.pallas import tpu as pltpu


# ----------------------------------------------------------------------------
# Pallas kernel: conv1x1 -> BN -> ReLU -> conv3x3(pad=1) -> BN -> ReLU
#                -> conv1x1 -> BN -> +identity -> ReLU      (one image / step)
# ----------------------------------------------------------------------------
def bottleneck_kernel(x_ref, w1_ref, b1_ref, w2_ref, b2_ref, w3_ref, b3_ref,
                      out_ref, hp_ref):
    _, H, W, Cin = x_ref.shape
    width = w1_ref.shape[1]
    Cout = w3_ref.shape[1]

    x = x_ref[...].reshape(H * W, Cin)                       # f32 activation tile

    # ---- conv1: 1x1 conv == channel matmul (BN1 folded into w1/b1) + ReLU ---
    h = jnp.dot(x.astype(jnp.bfloat16), w1_ref[...],
                preferred_element_type=jnp.float32)          # (H*W, width) f32
    h = jnp.maximum(h + b1_ref[...], 0.0)

    # ---- conv2: 3x3, stride=1, pad=1 via im2col -> single K = 9*width matmul
    # Zero only the 1-pixel halo rows of the padded scratch; the interior rows
    # (including the left/right halo columns) are written in a single store.
    h3d = h.reshape(H, W, width)
    zcol = jnp.zeros((H, 1, width), jnp.float32)
    hp_ref[0:1, :, :] = jnp.zeros((1, W + 2, width), jnp.float32)
    hp_ref[H + 1:H + 2, :, :] = jnp.zeros((1, W + 2, width), jnp.float32)
    hp_ref[1:H + 1, :, :] = jnp.concatenate([zcol, h3d, zcol], axis=1)

    cols = jnp.concatenate(
        [hp_ref[dy:dy + H, dx:dx + W, :] for dy in range(3) for dx in range(3)],
        axis=-1)                                             # (H, W, 9*width)
    h2 = jnp.dot(cols.reshape(H * W, 9 * width).astype(jnp.bfloat16),
                 w2_ref[...], preferred_element_type=jnp.float32)
    h2 = jnp.maximum(h2 + b2_ref[...], 0.0)                  # BN2 folded + ReLU

    # ---- conv3: 1x1 conv (BN3 folded) ---------------------------------------
    h3 = jnp.dot(h2.astype(jnp.bfloat16), w3_ref[...],
                 preferred_element_type=jnp.float32) + b3_ref[...]

    # ---- residual add (identity branch) + final ReLU ------------------------
    # TODO(synk): downsample branch / stride>1 not implemented (PyTorch default
    #             config: downsample=None, stride=1, Cin == Cout*expansion).
    out_ref[...] = jnp.maximum(h3 + x, 0.0).reshape(out_ref.shape)


# ----------------------------------------------------------------------------
# Wrapper: fold BN into weights, set up grid / BlockSpecs
# ----------------------------------------------------------------------------
def fold_bn(gamma, beta, mean, var, eps=1e-5):
    scale = gamma / jnp.sqrt(var + eps)
    bias = beta - mean * scale
    return scale, bias


def prepare_params(params, eps=1e-5):
    """Fold BN scale into conv weights (bf16) and keep per-channel f32 biases."""
    s1, b1 = fold_bn(params["g1"], params["be1"], params["m1"], params["v1"], eps)
    s2, b2 = fold_bn(params["g2"], params["be2"], params["m2"], params["v2"], eps)
    s3, b3 = fold_bn(params["g3"], params["be3"], params["m3"], params["v3"], eps)
    width = params["w1"].shape[1]

    w1f = (params["w1"] * s1[None, :]).astype(jnp.bfloat16)              # (Cin, width)
    w2f = (params["w2"] * s2[None, None, None, :]).astype(jnp.bfloat16)  # (3,3,w,w) HWIO
    w2f = w2f.reshape(9 * width, width)                                  # im2col weight
    w3f = (params["w3"] * s3[None, :]).astype(jnp.bfloat16)              # (width, Cout)

    return {
        "w1": w1f, "b1": b1.reshape(1, -1).astype(jnp.float32),
        "w2": w2f, "b2": b2.reshape(1, -1).astype(jnp.float32),
        "w3": w3f, "b3": b3.reshape(1, -1).astype(jnp.float32),
    }


@jax.jit
def bottleneck_forward(x_nchw, folded):
    # NCHW -> NHWC
    x = jnp.transpose(x_nchw, (0, 2, 3, 1)).astype(jnp.float32)
    N, H, W, Cin = x.shape
    width = folded["w1"].shape[1]
    Cout = folded["w3"].shape[1]
    assert Cin == Cout, "default Bottleneck config: identity residual"

    out_nhwc = pl.pallas_call(
        bottleneck_kernel,
        out_shape=jax.ShapeDtypeStruct((N, H, W, Cout), jnp.float32),
        grid=(N,),
        in_specs=[
            pl.BlockSpec((1, H, W, Cin), lambda n: (n, 0, 0, 0)),     # x tile
            pl.BlockSpec((Cin, width), lambda n: (0, 0)),             # w1 (bf16)
            pl.BlockSpec((1, width), lambda n: (0, 0)),               # b1
            pl.BlockSpec((9 * width, width), lambda n: (0, 0)),       # w2 im2col (bf16)
            pl.BlockSpec((1, width), lambda n: (0, 0)),               # b2
            pl.BlockSpec((width, Cout), lambda n: (0, 0)),            # w3 (bf16)
            pl.BlockSpec((1, Cout), lambda n: (0, 0)),                # b3
        ],
        out_specs=pl.BlockSpec((1, H, W, Cout), lambda n: (n, 0, 0, 0)),
        scratch_shapes=[pltpu.VMEM((H + 2, W + 2, width), jnp.float32)],
        compiler_params=pltpu.CompilerParams(
            dimension_semantics=("parallel",),            # megacore on v7x
            vmem_limit_bytes=48 * 1024 * 1024),           # safe on v5e/v6e/v7x
    )(x, folded["w1"], folded["b1"], folded["w2"], folded["b2"],
      folded["w3"], folded["b3"])

    # back to NCHW to match PyTorch output layout
    return jnp.transpose(out_nhwc, (0, 3, 1, 2))


# ----------------------------------------------------------------------------
# Pure-JAX reference (same folded bf16 weights -> same MXU truncation)
# ----------------------------------------------------------------------------
def bottleneck_reference(x_nchw, folded):
    x = jnp.transpose(x_nchw, (0, 2, 3, 1)).astype(jnp.float32)      # NHWC
    width = folded["w1"].shape[1]
    dn = ("NHWC", "HWIO", "NHWC")

    w1 = folded["w1"][None, None]                       # (1,1,Cin,width)  bf16
    w2 = folded["w2"].reshape(3, 3, width, width)       # (3,3,w,w) HWIO   bf16
    w3 = folded["w3"][None, None]                       # (1,1,width,Cout) bf16

    h = jax.lax.conv_general_dilated(x.astype(jnp.bfloat16), w1, (1, 1), "VALID",
                                     dimension_numbers=dn,
                                     preferred_element_type=jnp.float32)
    h = jnp.maximum(h + folded["b1"].reshape(1, 1, 1, -1), 0.0)
    h = jax.lax.conv_general_dilated(h.astype(jnp.bfloat16), w2, (1, 1),
                                     ((1, 1), (1, 1)), dimension_numbers=dn,
                                     preferred_element_type=jnp.float32)
    h = jnp.maximum(h + folded["b2"].reshape(1, 1, 1, -1), 0.0)
    h = jax.lax.conv_general_dilated(h.astype(jnp.bfloat16), w3, (1, 1), "VALID",
                                     dimension_numbers=dn,
                                     preferred_element_type=jnp.float32)
    h = h + folded["b3"].reshape(1, 1, 1, -1)
    h = jnp.maximum(h + x, 0.0)
    return jnp.transpose(h, (0, 3, 1, 2))


# ----------------------------------------------------------------------------
# Main
# ----------------------------------------------------------------------------
if __name__ == "__main__":
    # Bottleneck(in_channel=64, out_channel=16, stride=1, downsample=None)
    # => width = 16, output channels = 16 * 4 = 64 (matches identity branch).
    in_channel, out_channel, expansion = 64, 16, 4
    width = out_channel                      # width_per_group=64, groups=1
    cout = out_channel * expansion
    N, H, W = 2, 16, 16

    key = jax.random.PRNGKey(0)
    ks = jax.random.split(key, 16)

    params = {
        # conv weights stored as (Cin, Cout) / HWIO for NHWC math
        "w1": 0.05 * jax.random.normal(ks[0], (in_channel, width), jnp.float32),
        "w2": 0.05 * jax.random.normal(ks[1], (3, 3, width, width), jnp.float32),
        "w3": 0.05 * jax.random.normal(ks[2], (width, cout), jnp.float32),
        # BN1
        "g1": 1.0 + 0.1 * jax.random.normal(ks[3], (width,), jnp.float32),
        "be1": 0.1 * jax.random.normal(ks[4], (width,), jnp.float32),
        "m1": 0.1 * jax.random.normal(ks[5], (width,), jnp.float32),
        "v1": 1.0 + 0.1 * jax.random.uniform(ks[6], (width,), jnp.float32),
        # BN2
        "g2": 1.0 + 0.1 * jax.random.normal(ks[7], (width,), jnp.float32),
        "be2": 0.1 * jax.random.normal(ks[8], (width,), jnp.float32),
        "m2": 0.1 * jax.random.normal(ks[9], (width,), jnp.float32),
        "v2": 1.0 + 0.1 * jax.random.uniform(ks[10], (width,), jnp.float32),
        # BN3
        "g3": 1.0 + 0.1 * jax.random.normal(ks[11], (cout,), jnp.float32),
        "be3": 0.1 * jax.random.normal(ks[12], (cout,), jnp.float32),
        "m3": 0.1 * jax.random.normal(ks[13], (cout,), jnp.float32),
        "v3": 1.0 + 0.1 * jax.random.uniform(ks[14], (cout,), jnp.float32),
    }

    x = jax.random.normal(ks[15], (N, in_channel, H, W), jnp.float32)  # NCHW

    folded = prepare_params(params)

    out = jax.block_until_ready(bottleneck_forward(x, folded))
    ref = jax.block_until_ready(bottleneck_reference(x, folded))

    assert out.shape == (N, cout, H, W)
    max_diff = jnp.max(jnp.abs(out - ref))
    assert jnp.allclose(out, ref, rtol=1e-3, atol=1e-3), (
        f"max abs diff = {max_diff}")

    print("KERNEL_OK")
</pallas_src>

<mosaic_0001>
module attributes {stable_mosaic.version = 11 : i64} {
  func.func @bottleneck_kernel(%arg0: i32, %arg1: memref<1x16x16x64xf32, #tpu.memory_space<vmem>>, %arg2: memref<64x16xbf16, #tpu.memory_space<vmem>>, %arg3: memref<1x16xf32, #tpu.memory_space<vmem>>, %arg4: memref<144x16xbf16, #tpu.memory_space<vmem>>, %arg5: memref<1x16xf32, #tpu.memory_space<vmem>>, %arg6: memref<16x64xbf16, #tpu.memory_space<vmem>>, %arg7: memref<1x64xf32, #tpu.memory_space<vmem>>, %arg8: memref<1x16x16x64xf32, #tpu.memory_space<vmem>>, %arg9: memref<18x18x16xf32, #tpu.memory_space<vmem>>) attributes {dimension_semantics = [#tpu.dimension_semantics<parallel>], iteration_bounds = array<i64: 2>, scalar_prefetch = 0 : i64, scratch_operands = 1 : i64, tpu.core_type = #tpu.core_type<tc>, window_params = [{transform_indices = @transform_0, window_bounds = array<i64: 1, 16, 16, 64>}, {pipeline_mode = #tpu.pipeline_mode<synchronous>, transform_indices = @transform_1, window_bounds = array<i64: 64, 16>}, {pipeline_mode = #tpu.pipeline_mode<synchronous>, transform_indices = @transform_2, window_bounds = array<i64: 1, 16>}, {pipeline_mode = #tpu.pipeline_mode<synchronous>, transform_indices = @transform_3, window_bounds = array<i64: 144, 16>}, {pipeline_mode = #tpu.pipeline_mode<synchronous>, transform_indices = @transform_4, window_bounds = array<i64: 1, 16>}, {pipeline_mode = #tpu.pipeline_mode<synchronous>, transform_indices = @transform_5, window_bounds = array<i64: 16, 64>}, {pipeline_mode = #tpu.pipeline_mode<synchronous>, transform_indices = @transform_6, window_bounds = array<i64: 1, 64>}, {transform_indices = @transform_7, window_bounds = array<i64: 1, 16, 16, 64>}]} {
    %c0 = arith.constant 0 : index
    %c0_0 = arith.constant 0 : index
    %c0_1 = arith.constant 0 : index
    %c0_2 = arith.constant 0 : index
    %0 = vector.load %arg1[%c0, %c0_0, %c0_1, %c0_2] : memref<1x16x16x64xf32, #tpu.memory_space<vmem>>, vector<1x16x16x64xf32>
    %1 = vector.shape_cast %0 : vector<1x16x16x64xf32> to vector<256x64xf32>
    %2 = arith.truncf %1 : vector<256x64xf32> to vector<256x64xbf16>
    %c0_3 = arith.constant 0 : index
    %c0_4 = arith.constant 0 : index
    %3 = vector.load %arg2[%c0_3, %c0_4] : memref<64x16xbf16, #tpu.memory_space<vmem>>, vector<64x16xbf16>
    %cst = arith.constant dense<0.000000e+00> : vector<256x16xf32>
    %4 = tpu.matmul %2, %3, %cst {dimension_numbers = #tpu.dot_dimension_numbers<[1], [0], [0], [1], [0, 0, 1, 1], [], []>} : vector<256x64xbf16>, vector<64x16xbf16>, vector<256x16xf32> -> vector<256x16xf32>
    %c0_5 = arith.constant 0 : index
    %c0_6 = arith.constant 0 : index
    %5 = vector.load %arg3[%c0_5, %c0_6] : memref<1x16xf32, #tpu.memory_space<vmem>>, vector<1x16xf32>
    %6 = vector.broadcast %5 : vector<1x16xf32> to vector<256x16xf32>
    %7 = arith.addf %4, %6 : vector<256x16xf32>
    %cst_7 = arith.constant 0.000000e+00 : f32
    %8 = vector.broadcast %cst_7 : f32 to vector<256x16xf32>
    %9 = arith.maximumf %7, %8 : vector<256x16xf32>
    %10 = vector.shape_cast %9 : vector<256x16xf32> to vector<16x16x16xf32>
    %cst_8 = arith.constant 0.000000e+00 : f32
    %11 = vector.broadcast %cst_8 : f32 to vector<16x1x16xf32>
    %cst_9 = arith.constant 0.000000e+00 : f32
    %12 = vector.broadcast %cst_9 : f32 to vector<1x18x16xf32>
    %c0_10 = arith.constant 0 : index
    %c0_11 = arith.constant 0 : index
    %c0_12 = arith.constant 0 : index
    %13 = vector.load %arg9[%c0_10, %c0_11, %c0_12] : memref<18x18x16xf32, #tpu.memory_space<vmem>>, vector<1x18x16xf32>
    tpu.vector_store %arg9[%c0_10, %c0_11, %c0_12], %12 {strides = array<i32>} : memref<18x18x16xf32, #tpu.memory_space<vmem>>, vector<1x18x16xf32>,
    %cst_13 = arith.constant 0.000000e+00 : f32
    %14 = vector.broadcast %cst_13 : f32 to vector<1x18x16xf32>
    %c17 = arith.constant 17 : index
    %c0_14 = arith.constant 0 : index
    %c0_15 = arith.constant 0 : index
    %15 = vector.load %arg9[%c17, %c0_14, %c0_15] : memref<18x18x16xf32, #tpu.memory_space<vmem>>, vector<1x18x16xf32>
    tpu.vector_store %arg9[%c17, %c0_14, %c0_15], %14 {strides = array<i32>} : memref<18x18x16xf32, #tpu.memory_space<vmem>>, vector<1x18x16xf32>,
    %16 = tpu.concatenate %11, %10, %11 in 1 : vector<16x1x16xf32>, vector<16x16x16xf32>, vector<16x1x16xf32> -> vector<16x18x16xf32>
    %c1 = arith.constant 1 : index
    %c0_16 = arith.constant 0 : index
    %c0_17 = arith.constant 0 : index
    %17 = vector.load %arg9[%c1, %c0_16, %c0_17] : memref<18x18x16xf32, #tpu.memory_space<vmem>>, vector<16x18x16xf32>
    tpu.vector_store %arg9[%c1, %c0_16, %c0_17], %16 {strides = array<i32>} : memref<18x18x16xf32, #tpu.memory_space<vmem>>, vector<16x18x16xf32>,
    %c0_18 = arith.constant 0 : index
    %c0_19 = arith.constant 0 : index
    %c0_20 = arith.constant 0 : index
    %18 = vector.load %arg9[%c0_18, %c0_19, %c0_20] : memref<18x18x16xf32, #tpu.memory_space<vmem>>, vector<16x16x16xf32>
    %c0_21 = arith.constant 0 : index
    %c1_22 = arith.constant 1 : index
    %c0_23 = arith.constant 0 : index
    %19 = vector.load %arg9[%c0_21, %c1_22, %c0_23] : memref<18x18x16xf32, #tpu.memory_space<vmem>>, vector<16x16x16xf32>
    %c0_24 = arith.constant 0 : index
    %c2 = arith.constant 2 : index
    %c0_25 = arith.constant 0 : index
    %20 = vector.load %arg9[%c0_24, %c2, %c0_25] : memref<18x18x16xf32, #tpu.memory_space<vmem>>, vector<16x16x16xf32>
    %c1_26 = arith.constant 1 : index
    %c0_27 = arith.constant 0 : index
    %c0_28 = arith.constant 0 : index
    %21 = vector.load %arg9[%c1_26, %c0_27, %c0_28] : memref<18x18x16xf32, #tpu.memory_space<vmem>>, vector<16x16x16xf32>
    %c1_29 = arith.constant 1 : index
    %c1_30 = arith.constant 1 : index
    %c0_31 = arith.constant 0 : index
    %22 = vector.load %arg9[%c1_29, %c1_30, %c0_31] : memref<18x18x16xf32, #tpu.memory_space<vmem>>, vector<16x16x16xf32>
    %c1_32 = arith.constant 1 : index
    %c2_33 = arith.constant 2 : index
    %c0_34 = arith.constant 0 : index
    %23 = vector.load %arg9[%c1_32, %c2_33, %c0_34] : memref<18x18x16xf32, #tpu.memory_space<vmem>>, vector<16x16x16xf32>
    %c2_35 = arith.constant 2 : index
    %c0_36 = arith.constant 0 : index
    %c0_37 = arith.constant 0 : index
    %24 = vector.load %arg9[%c2_35, %c0_36, %c0_37] : memref<18x18x16xf32, #tpu.memory_space<vmem>>, vector<16x16x16xf32>
    %c2_38 = arith.constant 2 : index
    %c1_39 = arith.constant 1 : index
    %c0_40 = arith.constant 0 : index
    %25 = vector.load %arg9[%c2_38, %c1_39, %c0_40] : memref<18x18x16xf32, #tpu.memory_space<vmem>>, vector<16x16x16xf32>
    %c2_41 = arith.constant 2 : index
    %c2_42 = arith.constant 2 : index
    %c0_43 = arith.constant 0 : index
    %26 = vector.load %arg9[%c2_41, %c2_42, %c0_43] : memref<18x18x16xf32, #tpu.memory_space<vmem>>, vector<16x16x16xf32>
    %27 = tpu.concatenate %18, %19, %20, %21, %22, %23, %24, %25, %26 in 2 : vector<16x16x16xf32>, vector<16x16x16xf32>, vector<16x16x16xf32>, vector<16x16x16xf32>, vector<16x16x16xf32>, vector<16x16x16xf32>, vector<16x16x16xf32>, vector<16x16x16xf32>, vector<16x16x16xf32> -> vector<16x16x144xf32>
    %28 = vector.shape_cast %27 : vector<16x16x144xf32> to vector<256x144xf32>
    %29 = arith.truncf %28 : vector<256x144xf32> to vector<256x144xbf16>
    %c0_44 = arith.constant 0 : index
    %c0_45 = arith.constant 0 : index
    %30 = vector.load %arg4[%c0_44, %c0_45] : memref<144x16xbf16, #tpu.memory_space<vmem>>, vector<144x16xbf16>
    %cst_46 = arith.constant dense<0.000000e+00> : vector<256x16xf32>
    %31 = tpu.matmul %29, %30, %cst_46 {dimension_numbers = #tpu.dot_dimension_numbers<[1], [0], [0], [1], [0, 0, 1, 1], [], []>} : vector<256x144xbf16>, vector<144x16xbf16>, vector<256x16xf32> -> vector<256x16xf32>
    %c0_47 = arith.constant 0 : index
    %c0_48 = arith.constant 0 : index
    %32 = vector.load %arg5[%c0_47, %c0_48] : memref<1x16xf32, #tpu.memory_space<vmem>>, vector<1x16xf32>
    %33 = vector.broadcast %32 : vector<1x16xf32> to vector<256x16xf32>
    %34 = arith.addf %31, %33 : vector<256x16xf32>
    %cst_49 = arith.constant 0.000000e+00 : f32
    %35 = vector.broadcast %cst_49 : f32 to vector<256x16xf32>
    %36 = arith.maximumf %34, %35 : vector<256x16xf32>
    %37 = arith.truncf %36 : vector<256x16xf32> to vector<256x16xbf16>
    %c0_50 = arith.constant 0 : index
    %c0_51 = arith.constant 0 : index
    %38 = vector.load %arg6[%c0_50, %c0_51] : memref<16x64xbf16, #tpu.memory_space<vmem>>, vector<16x64xbf16>
    %cst_52 = arith.constant dense<0.000000e+00> : vector<256x64xf32>
    %39 = tpu.matmul %37, %38, %cst_52 {dimension_numbers = #tpu.dot_dimension_numbers<[1], [0], [0], [1], [0, 0, 1, 1], [], []>} : vector<256x16xbf16>, vector<16x64xbf16>, vector<256x64xf32> -> vector<256x64xf32>
    %c0_53 = arith.constant 0 : index
    %c0_54 = arith.constant 0 : index
    %40 = vector.load %arg7[%c0_53, %c0_54] : memref<1x64xf32, #tpu.memory_space<vmem>>, vector<1x64xf32>
    %41 = vector.broadcast %40 : vector<1x64xf32> to vector<256x64xf32>
    %42 = arith.addf %39, %41 : vector<256x64xf32>
    %43 = arith.addf %42, %1 : vector<256x64xf32>
    %cst_55 = arith.constant 0.000000e+00 : f32
    %44 = vector.broadcast %cst_55 : f32 to vector<256x64xf32>
    %45 = arith.maximumf %43, %44 : vector<256x64xf32>
    %46 = vector.shape_cast %45 : vector<256x64xf32> to vector<1x16x16x64xf32>
    %c0_56 = arith.constant 0 : index
    %c0_57 = arith.constant 0 : index
    %c0_58 = arith.constant 0 : index
    %c0_59 = arith.constant 0 : index
    %47 = vector.load %arg8[%c0_56, %c0_57, %c0_58, %c0_59] : memref<1x16x16x64xf32, #tpu.memory_space<vmem>>, vector<1x16x16x64xf32>
    tpu.vector_store %arg8[%c0_56, %c0_57, %c0_58, %c0_59], %46 {strides = array<i32>} : memref<1x16x16x64xf32, #tpu.memory_space<vmem>>, vector<1x16x16x64xf32>,
    return
  }
  func.func @transform_0(%arg0: i32) -> (i32, i32, i32, i32) {
    %c0_i32 = arith.constant 0 : i32
    %c0_i32_0 = arith.constant 0 : i32
    %c0_i32_1 = arith.constant 0 : i32
    %c0_i32_2 = arith.constant 0 : i32
    return %arg0, %c0_i32, %c0_i32_0, %c0_i32_1 : i32, i32, i32, i32
  }
  func.func @transform_1(%arg0: i32) -> (i32, i32) {
    %c0_i32 = arith.constant 0 : i32
    %c0_i32_0 = arith.constant 0 : i32
    %c0_i32_1 = arith.constant 0 : i32
    return %c0_i32, %c0_i32_0 : i32, i32
  }
  func.func @transform_2(%arg0: i32) -> (i32, i32) {
    %c0_i32 = arith.constant 0 : i32
    %c0_i32_0 = arith.constant 0 : i32
    %c0_i32_1 = arith.constant 0 : i32
    return %c0_i32, %c0_i32_0 : i32, i32
  }
  func.func @transform_3(%arg0: i32) -> (i32, i32) {
    %c0_i32 = arith.constant 0 : i32
    %c0_i32_0 = arith.constant 0 : i32
    %c0_i32_1 = arith.constant 0 : i32
    return %c0_i32, %c0_i32_0 : i32, i32
  }
  func.func @transform_4(%arg0: i32) -> (i32, i32) {
    %c0_i32 = arith.constant 0 : i32
    %c0_i32_0 = arith.constant 0 : i32
    %c0_i32_1 = arith.constant 0 : i32
    return %c0_i32, %c0_i32_0 : i32, i32
  }
  func.func @transform_5(%arg0: i32) -> (i32, i32) {
    %c0_i32 = arith.constant 0 : i32
    %c0_i32_0 = arith.constant 0 : i32
    %c0_i32_1 = arith.constant 0 : i32
    return %c0_i32, %c0_i32_0 : i32, i32
  }
  func.func @transform_6(%arg0: i32) -> (i32, i32) {
    %c0_i32 = arith.constant 0 : i32
    %c0_i32_0 = arith.constant 0 : i32
    %c0_i32_1 = arith.constant 0 : i32
    return %c0_i32, %c0_i32_0 : i32, i32
  }
  func.func @transform_7(%arg0: i32) -> (i32, i32, i32, i32) {
    %c0_i32 = arith.constant 0 : i32
    %c0_i32_0 = arith.constant 0 : i32
    %c0_i32_1 = arith.constant 0 : i32
    %c0_i32_2 = arith.constant 0 : i32
    return %arg0, %c0_i32, %c0_i32_0, %c0_i32_1 : i32, i32, i32, i32
  }
}

</mosaic_0001>

<llo_original>
// kernel: bottleneck_forward.1
$region0: #{bottleneck_forward.1}
  #allocation0 [shape = 'u32[]', space=smem, size = 0x4, offset = 0x4, fixed_abs, tag = 'smem constant byte address 0x4 - core index']
  #allocation1 [shape = 'u32[144,128]{1,0:T(1,128)}', space=vmem, size = 0x12000, scoped, tag = 'internal scratch']
  #allocation2 [shape = 'f32[18,18,16]{2,1,0:T(8,128)}', space=vmem, size = 0x36000, scoped, tag = 'scratch operand']
  %s0 = inlined_call_operand.hbm [shape: f32[2,16,16,64], index: 0, kind: input, shape index: {}]
  %s1 = inlined_call_operand.vmem [shape: bf16[64,16], index: 1, kind: input, shape index: {}]
  %s2 = inlined_call_operand.vmem [shape: f32[1,16], index: 2, kind: input, shape index: {}]
  %s3 = inlined_call_operand.vmem [shape: bf16[144,16], index: 3, kind: input, shape index: {}]
  %s4 = inlined_call_operand.vmem [shape: f32[1,16], index: 4, kind: input, shape index: {}]
  %s5 = inlined_call_operand.vmem [shape: bf16[16,64], index: 5, kind: input, shape index: {}]
  %s6 = inlined_call_operand.vmem [shape: f32[1,64], index: 6, kind: input, shape index: {}]
  %s7 = inlined_call_operand.hbm [shape: f32[2,16,16,64], index: 7, kind: output, shape index: {}]
  %s8 = sld [smem:[#allocation0]]
  $region65: #{bottleneck_forward.1} parent=0
    _
  %s10 = ssub.s32 1, %s8
  %s11 = scalar_select 0, %s10, %s8
  $region1: #{bottleneck_forward.1} parent=0
    #allocation3 [shape = 'u8[262144]{0}', space=vmem, size = 0x40000, scoped, tag = 'input window, operand 0']
    #allocation4 [shape = 's32[2]{0}', space=sflag, size = 0x8, scoped, tag = 'scoped memory for bottleneck_forward.1']
    #allocation5 [shape = 's32[2]{0}', space=sflag, size = 0x8, scoped, tag = 'scoped memory for bottleneck_forward.1']
    #allocation6 [shape = 'u8[262144]{0}', space=vmem, size = 0x40000, scoped, tag = 'output window, operand 0']
    %12 = vsyncpa [#allocation4], 0
    %s13 = scalar_lea.sflag [#allocation4], 1
    %14 = vsyncpa %s13, 0
    %15 = vsyncpa [#allocation5], 0
    %s16 = scalar_lea.sflag [#allocation5], 1
    %17 = vsyncpa %s16, 0
    loop: start=0, step=1, limit=4
    $region2: #{bottleneck_forward.1} parent=1 // loop_pre_header
      _
    $region3: #{bottleneck_forward.1} parent=1 // loop_header
      %s19 = sphi 0, %s23
      %p20 = scmp.ge.s32.totalorder %s19, 4
      %s29 = sphi 0, %s31
      %s32 = sphi 0, %s29
      %s33 = sphi 0, %s32
      %s49 = sphi 0, %s33
      %s53 = sphi 0, %s53
      %s55 = sphi 0, %s53
      %s56 = sphi 0, %s55
      %s70 = sphi 0, %s56
      %s74 = sphi 0, %s74
      %s76 = sphi 0, %s74
      %s77 = sphi 0, %s76
      %s91 = sphi 0, %s77
      %s95 = sphi 0, %s95
      %s97 = sphi 0, %s95
      %s98 = sphi 0, %s97
      %s112 = sphi 0, %s98
      %s116 = sphi 0, %s116
      %s118 = sphi 0, %s116
      %s119 = sphi 0, %s118
      %s133 = sphi 0, %s119
      %s137 = sphi 0, %s137
      %s139 = sphi 0, %s137
      %s140 = sphi 0, %s139
      %s154 = sphi 0, %s140
      %s158 = sphi 0, %s158
      %s160 = sphi 0, %s158
      %s161 = sphi 0, %s160
      %s175 = sphi 0, %s161
      %s181 = sphi 0, %s183
      %s184 = sphi 0, %s181
      %s185 = sphi 0, %s184
      %s201 = sphi 0, %s185
    $region4: #{bottleneck_forward.1} parent=1 // loop_header_branch
      %22 = sbr.rel (%p20) target = $region8
    $region5: #{bottleneck_forward.1} parent=1 // loop_body
      %s24 = ssub.s32 %s19, 1
      %s25 = ssub.s32 %s19, 2
      %s26 = sadd.s32 %s19, 1
      %s27 = ssub.s32 %s19, %s26
      %p28 = scmp.eq.s32.totalorder %s27, 0
      %s30 = sadd.s32 %s29, 1
      %s31 = scalar_select %p28, %s29, %s30
      %p34 = pneg %p28
      %p35 = scmp.eq.s32.totalorder %s19, 1
      %p36 = por %p34, %p35
      %p37 = scmp.ne.s32.totalorder %s29, %s32
      %p38 = scmp.eq.s32.totalorder %s19, 0
      %p39 = por %p37, %p38
      %p40 = scmp.ne.s32.totalorder %s29, %s32
      %p41 = scmp.eq.s32.totalorder %s24, 1
      %p42 = por %p40, %p41
      %p43 = scmp.ne.s32.totalorder %s32, %s33
      %p44 = scmp.eq.s32.totalorder %s24, 0
      %p45 = por %p43, %p44
      %p46 = scmp.ne.s32.totalorder %s32, %s33
      %p47 = scmp.eq.s32.totalorder %s25, 1
      %p48 = por %p46, %p47
      %p50 = scmp.ne.s32.totalorder %s33, %s49
      %p51 = scmp.eq.s32.totalorder %s25, 0
      %p52 = por %p50, %p51
      %s54 = sadd.s32 %s53, 1
      %p57 = scmp.eq.s32.totalorder %s19, 1
      %p58 = scmp.ne.s32.totalorder %s53, %s55
      %p59 = scmp.eq.s32.totalorder %s19, 0
      %p60 = por %p58, %p59
      %p61 = scmp.ne.s32.totalorder %s53, %s55
      %p62 = scmp.eq.s32.totalorder %s24, 1
      %p63 = por %p61, %p62
      %p64 = scmp.ne.s32.totalorder %s55, %s56
      %p65 = scmp.eq.s32.totalorder %s24, 0
      %p66 = por %p64, %p65
      %p67 = scmp.ne.s32.totalorder %s55, %s56
      %p68 = scmp.eq.s32.totalorder %s25, 1
      %p69 = por %p67, %p68
      %p71 = scmp.ne.s32.totalorder %s56, %s70
      %p72 = scmp.eq.s32.totalorder %s25, 0
      %p73 = por %p71, %p72
      %s75 = sadd.s32 %s74, 1
      %p78 = scmp.eq.s32.totalorder %s19, 1
      %p79 = scmp.ne.s32.totalorder %s74, %s76
      %p80 = scmp.eq.s32.totalorder %s19, 0
      %p81 = por %p79, %p80
      %p82 = scmp.ne.s32.totalorder %s74, %s76
      %p83 = scmp.eq.s32.totalorder %s24, 1
      %p84 = por %p82, %p83
      %p85 = scmp.ne.s32.totalorder %s76, %s77
      %p86 = scmp.eq.s32.totalorder %s24, 0
      %p87 = por %p85, %p86
      %p88 = scmp.ne.s32.totalorder %s76, %s77
      %p89 = scmp.eq.s32.totalorder %s25, 1
      %p90 = por %p88, %p89
      %p92 = scmp.ne.s32.totalorder %s77, %s91
      %p93 = scmp.eq.s32.totalorder %s25, 0
      %p94 = por %p92, %p93
      %s96 = sadd.s32 %s95, 1
      %p99 = scmp.eq.s32.totalorder %s19, 1
      %p100 = scmp.ne.s32.totalorder %s95, %s97
      %p101 = scmp.eq.s32.totalorder %s19, 0
      %p102 = por %p100, %p101
      %p103 = scmp.ne.s32.totalorder %s95, %s97
      %p104 = scmp.eq.s32.totalorder %s24, 1
      %p105 = por %p103, %p104
      %p106 = scmp.ne.s32.totalorder %s97, %s98
      %p107 = scmp.eq.s32.totalorder %s24, 0
      %p108 = por %p106, %p107
      %p109 = scmp.ne.s32.totalorder %s97, %s98
      %p110 = scmp.eq.s32.totalorder %s25, 1
      %p111 = por %p109, %p110
      %p113 = scmp.ne.s32.totalorder %s98, %s112
      %p114 = scmp.eq.s32.totalorder %s25, 0
      %p115 = por %p113, %p114
      %s117 = sadd.s32 %s116, 1
      %p120 = scmp.eq.s32.totalorder %s19, 1
      %p121 = scmp.ne.s32.totalorder %s116, %s118
      %p122 = scmp.eq.s32.totalorder %s19, 0
      %p123 = por %p121, %p122
      %p124 = scmp.ne.s32.totalorder %s116, %s118
      %p125 = scmp.eq.s32.totalorder %s24, 1
      %p126 = por %p124, %p125
      %p127 = scmp.ne.s32.totalorder %s118, %s119
      %p128 = scmp.eq.s32.totalorder %s24, 0
      %p129 = por %p127, %p128
      %p130 = scmp.ne.s32.totalorder %s118, %s119
      %p131 = scmp.eq.s32.totalorder %s25, 1
      %p132 = por %p130, %p131
      %p134 = scmp.ne.s32.totalorder %s119, %s133
      %p135 = scmp.eq.s32.totalorder %s25, 0
      %p136 = por %p134, %p135
      %s138 = sadd.s32 %s137, 1
      %p141 = scmp.eq.s32.totalorder %s19, 1
      %p142 = scmp.ne.s32.totalorder %s137, %s139
      %p143 = scmp.eq.s32.totalorder %s19, 0
      %p144 = por %p142, %p143
      %p145 = scmp.ne.s32.totalorder %s137, %s139
      %p146 = scmp.eq.s32.totalorder %s24, 1
      %p147 = por %p145, %p146
      %p148 = scmp.ne.s32.totalorder %s139, %s140
      %p149 = scmp.eq.s32.totalorder %s24, 0
      %p150 = por %p148, %p149
      %p151 = scmp.ne.s32.totalorder %s139, %s140
      %p152 = scmp.eq.s32.totalorder %s25, 1
      %p153 = por %p151, %p152
      %p155 = scmp.ne.s32.totalorder %s140, %s154
      %p156 = scmp.eq.s32.totalorder %s25, 0
      %p157 = por %p155, %p156
      %s159 = sadd.s32 %s158, 1
      %p162 = scmp.eq.s32.totalorder %s19, 1
      %p163 = scmp.ne.s32.totalorder %s158, %s160
      %p164 = scmp.eq.s32.totalorder %s19, 0
      %p165 = por %p163, %p164
      %p166 = scmp.ne.s32.totalorder %s158, %s160
      %p167 = scmp.eq.s32.totalorder %s24, 1
      %p168 = por %p166, %p167
      %p169 = scmp.ne.s32.totalorder %s160, %s161
      %p170 = scmp.eq.s32.totalorder %s24, 0
      %p171 = por %p169, %p170
      %p172 = scmp.ne.s32.totalorder %s160, %s161
      %p173 = scmp.eq.s32.totalorder %s25, 1
      %p174 = por %p172, %p173
      %p176 = scmp.ne.s32.totalorder %s161, %s175
      %p177 = scmp.eq.s32.totalorder %s25, 0
      %p178 = por %p176, %p177
      %s179 = ssub.s32 %s19, %s26
      %p180 = scmp.eq.s32.totalorder %s179, 0
      %s182 = sadd.s32 %s181, 1
      %s183 = scalar_select %p180, %s181, %s182
      %p186 = pneg %p180
      %p187 = scmp.eq.s32.totalorder %s19, 1
      %p188 = por %p186, %p187
      %p189 = scmp.ne.s32.totalorder %s181, %s184
      %p190 = scmp.eq.s32.totalorder %s19, 0
      %p191 = por %p189, %p190
      %p192 = scmp.ne.s32.totalorder %s181, %s184
      %p193 = scmp.eq.s32.totalorder %s24, 1
      %p194 = por %p192, %p193
      %p195 = scmp.ne.s32.totalorder %s184, %s185
      %p196 = scmp.eq.s32.totalorder %s24, 0
      %p197 = por %p195, %p196
      %p198 = scmp.ne.s32.totalorder %s184, %s185
      %p199 = scmp.eq.s32.totalorder %s25, 1
      %p200 = por %p198, %p199
      %p202 = scmp.ne.s32.totalorder %s185, %s201
      %p203 = scmp.eq.s32.totalorder %s25, 0
      %p204 = por %p202, %p203
      %p205 = scmp.le.s32.totalorder 1, %s19
      %p206 = scmp.lt.s32.totalorder %s19, 3
      %p207 = pnand %p205, %p206
      %p208 = pneg %p207
      // Predicated region
      $region9: #{bottleneck_forward.1} parent=5 // pred_check
        _
      $region10: #{bottleneck_forward.1} parent=5 // pred_check_branch
        %210 = sbr.rel (%p207) target = $region12
      $region11: #{bottleneck_forward.1} parent=5 // pred_region
        %s211 = ssub.s32 %s19, 1
        // Predicated region
        $region13: #{bottleneck_forward.1} parent=11 // pred_check
          %p212 = pneg %p66
        $region14: #{bottleneck_forward.1} parent=11 // pred_check_branch
          %214 = sbr.rel (%p212) target = $region16
        $region15: #{bottleneck_forward.1} parent=11 // pred_region
          _
        $region16: #{bottleneck_forward.1} parent=11 // pred_fallthru
          _
        // Predicated region
        $region17: #{bottleneck_forward.1} parent=11 // pred_check
          %p215 = pneg %p87
        $region18: #{bottleneck_forward.1} parent=11 // pred_check_branch
          %217 = sbr.rel (%p215) target = $region20
        $region19: #{bottleneck_forward.1} parent=11 // pred_region
          _
        $region20: #{bottleneck_forward.1} parent=11 // pred_fallthru
          _
        // Predicated region
        $region21: #{bottleneck_forward.1} parent=11 // pred_check
          %p218 = pneg %p108
        $region22: #{bottleneck_forward.1} parent=11 // pred_check_branch
          %220 = sbr.rel (%p218) target = $region24
        $region23: #{bottleneck_forward.1} parent=11 // pred_region
          _
        $region24: #{bottleneck_forward.1} parent=11 // pred_fallthru
          _
        // Predicated region
        $region25: #{bottleneck_forward.1} parent=11 // pred_check
          %p221 = pneg %p129
        $region26: #{bottleneck_forward.1} parent=11 // pred_check_branch
          %223 = sbr.rel (%p221) target = $region28
        $region27: #{bottleneck_forward.1} parent=11 // pred_region
          _
        $region28: #{bottleneck_forward.1} parent=11 // pred_fallthru
          _
        // Predicated region
        $region29: #{bottleneck_forward.1} parent=11 // pred_check
          %p224 = pneg %p150
        $region30: #{bottleneck_forward.1} parent=11 // pred_check_branch
          %226 = sbr.rel (%p224) target = $region32
        $region31: #{bottleneck_forward.1} parent=11 // pred_region
          _
        $region32: #{bottleneck_forward.1} parent=11 // pred_fallthru
          _
        // Predicated region
        $region33: #{bottleneck_forward.1} parent=11 // pred_check
          %p227 = pneg %p171
        $region34: #{bottleneck_forward.1} parent=11 // pred_check_branch
          %229 = sbr.rel (%p227) target = $region36
        $region35: #{bottleneck_forward.1} parent=11 // pred_region
          _
        $region36: #{bottleneck_forward.1} parent=11 // pred_fallthru
          _
      $region12: #{bottleneck_forward.1} parent=5 // pred_fallthru
        _
      %p230 = scmp.lt.s32.totalorder %s19, 2
      // Predicated region
      $region37: #{bottleneck_forward.1} parent=5 // pred_check
        %p231 = pneg %p230
      $region38: #{bottleneck_forward.1} parent=5 // pred_check_branch
        %233 = sbr.rel (%p231) target = $region40
      $region39: #{bottleneck_forward.1} parent=5 // pred_region
        // Predicated region
        $region41: #{bottleneck_forward.1} parent=39 // pred_check
          %p234 = pneg %p39
        $region42: #{bottleneck_forward.1} parent=39 // pred_check_branch
          %236 = sbr.rel (%p234) target = $region44
        $region43: #{bottleneck_forward.1} parent=39 // pred_region
          %s237 = sand.u32 %s29, 1
          %s238 = scalar_lea.sflag [#allocation4], %s237
          %s239 = sand.u32 %s29, 1
          %s240 = smul.addr %s239, 256
          %s241 = scalar_lea.vmem [#allocation3], %s240
          %s243 = ssub.s32 4096, 4096
          %244 = vsyncadd %s238, %s243
          %s245 = smul.addr %s19, 32
          %s246 = smul.addr %s245, 128
          %s247 = scalar_lea.hbm %s0, %s246
          %s248 = sshll.u32 %s241, 4
          %s249 = int_to_ptr.vmem [resolvable:$true] %s248
          %254 = dma.hbm_to_vmem [thread:$0]  %s247, 4096, %s249, %s238, 128, 128, 8
        $region44: #{bottleneck_forward.1} parent=39 // pred_fallthru
          _
      $region40: #{bottleneck_forward.1} parent=5 // pred_fallthru
        _
      %p255 = scmp.le.s32.totalorder 1, %s19
      %p256 = scmp.lt.s32.totalorder %s19, 3
      %p257 = pnand %p255, %p256
      %p258 = pneg %p257
      // Predicated region
      $region45: #{bottleneck_forward.1} parent=5 // pred_check
        _
      $region46: #{bottleneck_forward.1} parent=5 // pred_check_branch
        %260 = sbr.rel (%p257) target = $region48
      $region47: #{bottleneck_forward.1} parent=5 // pred_region
        %s261 = ssub.s32 %s19, 1
        %s262 = sand.u32 %s32, 1
        %s263 = scalar_lea.sflag [#allocation4], %s262
        %s264 = sand.u32 %s32, 1
        %s265 = smul.addr %s264, 256
        %s266 = scalar_lea.vmem [#allocation3], %s265
        // Predicated region
        $region49: #{bottleneck_forward.1} parent=47 // pred_check
          %p267 = pneg %p45
        $region50: #{bottleneck_forward.1} parent=47 // pred_check_branch
          %269 = sbr.rel (%p267) target = $region52
        $region51: #{bottleneck_forward.1} parent=47 // pred_region
          %270 = dma.done %s263, 4096
        $region52: #{bottleneck_forward.1} parent=47 // pred_fallthru
          _
        %s271 = sand.u32 %s32, 1
        %s272 = scalar_lea.sflag [#allocation4], %s271
        %s273 = sand.u32 %s32, 1
        %s274 = smul.addr %s273, 256
        %s275 = scalar_lea.vmem [#allocation3], %s274
        %p276 = pneg %p45
        %p277 = pneg %p42
        %p278 = pneg %p66
        %p279 = pneg %p63
        %p280 = pneg %p87
        %p281 = pneg %p84
        %p282 = pneg %p108
        %p283 = pneg %p105
        %p284 = pneg %p129
        %p285 = pneg %p126
        %p286 = pneg %p150
        %p287 = pneg %p147
        %p288 = pneg %p171
        %p289 = pneg %p168
        %p290 = pneg %p197
        %p291 = pneg %p194
        %s292 = sand.u32 %s184, 1
        %s293 = scalar_lea.sflag [#allocation5], %s292
        %s294 = sand.u32 %s184, 1
        %s295 = smul.addr %s294, 256
        %s296 = scalar_lea.vmem [#allocation6], %s295
        %v298 = vld [vmem:[%s266] sm:$0xff]
        %v299 = vld [vmem:[%s266 + $0x8] sm:$0xff]
        %v300 = vld [vmem:[%s266 + $0x10] sm:$0xff]
        %v301 = vld [vmem:[%s266 + $0x18] sm:$0xff]
        %v302 = vld [vmem:[%s266 + $0x20] sm:$0xff]
        %v303 = vld [vmem:[%s266 + $0x28] sm:$0xff]
        %v304 = vld [vmem:[%s266 + $0x30] sm:$0xff]
        %v305 = vld [vmem:[%s266 + $0x38] sm:$0xff]
        %v306 = vld [vmem:[%s266 + $0x40] sm:$0xff]
        %v307 = vld [vmem:[%s266 + $0x48] sm:$0xff]
        %v308 = vld [vmem:[%s266 + $0x50] sm:$0xff]
        %v309 = vld [vmem:[%s266 + $0x58] sm:$0xff]
        %v310 = vld [vmem:[%s266 + $0x60] sm:$0xff]
        %v311 = vld [vmem:[%s266 + $0x68] sm:$0xff]
        %v312 = vld [vmem:[%s266 + $0x70] sm:$0xff]
        %v313 = vld [vmem:[%s266 + $0x78] sm:$0xff]
        %v314 = vld [vmem:[%s266 + $0x80] sm:$0xff]
        %v315 = vld [vmem:[%s266 + $0x88] sm:$0xff]
        %v316 = vld [vmem:[%s266 + $0x90] sm:$0xff]
        %v317 = vld [vmem:[%s266 + $0x98] sm:$0xff]
        %v318 = vld [vmem:[%s266 + $0xa0] sm:$0xff]
        %v319 = vld [vmem:[%s266 + $0xa8] sm:$0xff]
        %v320 = vld [vmem:[%s266 + $0xb0] sm:$0xff]
        %v321 = vld [vmem:[%s266 + $0xb8] sm:$0xff]
        %v322 = vld [vmem:[%s266 + $0xc0] sm:$0xff]
        %v323 = vld [vmem:[%s266 + $0xc8] sm:$0xff]
        %v324 = vld [vmem:[%s266 + $0xd0] sm:$0xff]
        %v325 = vld [vmem:[%s266 + $0xd8] sm:$0xff]
        %v326 = vld [vmem:[%s266 + $0xe0] sm:$0xff]
        %v327 = vld [vmem:[%s266 + $0xe8] sm:$0xff]
        %v328 = vld [vmem:[%s266 + $0xf0] sm:$0xff]
        %v329 = vld [vmem:[%s266 + $0xf8] sm:$0xff]
        %v330 = vpack.c.bf16 %v299, %v298
        %v331 = vpack.c.bf16 %v301, %v300
        %v332 = vpack.c.bf16 %v303, %v302
        %v333 = vpack.c.bf16 %v305, %v304
        %v334 = vpack.c.bf16 %v307, %v306
        %v335 = vpack.c.bf16 %v309, %v308
        %v336 = vpack.c.bf16 %v311, %v310
        %v337 = vpack.c.bf16 %v313, %v312
        %v338 = vpack.c.bf16 %v315, %v314
        %v339 = vpack.c.bf16 %v317, %v316
        %v340 = vpack.c.bf16 %v319, %v318
        %v341 = vpack.c.bf16 %v321, %v320
        %v342 = vpack.c.bf16 %v323, %v322
        %v343 = vpack.c.bf16 %v325, %v324
        %v344 = vpack.c.bf16 %v327, %v326
        %v345 = vpack.c.bf16 %v329, %v328
        %v346 = vld [vmem:[%s1] sm:$0xf]
        %v347 = vld [vmem:[%s1 + $0x4] sm:$0xf]
        %v348 = vld [vmem:[%s1 + $0x8] sm:$0xf]
        %v349 = vld [vmem:[%s1 + $0xc] sm:$0xf]
        %v350 = vld [vmem:[%s1 + $0x10] sm:$0xf]
        %v351 = vld [vmem:[%s1 + $0x14] sm:$0xf]
        %v352 = vld [vmem:[%s1 + $0x18] sm:$0xf]
        %v353 = vld [vmem:[%s1 + $0x1c] sm:$0xf]
        %v354 = vld [vmem:[%s2] sm:$0x1]
        %v356 = vlaneseq
        %v357 = vshrl.u32 %v356, 7
        %v358 = vsub.s32 0, %v357
        %v359 = vrot.slane %v354, %v358
        %v369 = vunpack.c.l.b16 %v346
        %v370 = vunpack.c.l.b16 %v347
        %v371 = vunpack.c.l.b16 %v348
        %v372 = vunpack.c.l.b16 %v349
        %v373 = vunpack.c.l.b16 %v350
        %v374 = vunpack.c.l.b16 %v351
        %v375 = vunpack.c.l.b16 %v352
        %v376 = vunpack.c.l.b16 %v353
        %v377 = vpack.c.b16 %v370, %v369
        %v378 = vpack.c.b16 %v372, %v371
        %v379 = vpack.c.b16 %v374, %v373
        %v380 = vpack.c.b16 %v376, %v375
        %vm385 = vcmask 523264
        %v387 = vsel %vm385, %v330, 0
        %v390 = vsel %vm385, %v331, 0
        %v393 = vsel %vm385, %v332, 0
        %v396 = vsel %vm385, %v333, 0
        %v399 = vsel %vm385, %v334, 0
        %v402 = vsel %vm385, %v335, 0
        %v405 = vsel %vm385, %v336, 0
        %v408 = vsel %vm385, %v337, 0
        %v411 = vsel %vm385, %v338, 0
        %v414 = vsel %vm385, %v339, 0
        %v417 = vsel %vm385, %v340, 0
        %v420 = vsel %vm385, %v341, 0
        %v423 = vsel %vm385, %v342, 0
        %v426 = vsel %vm385, %v343, 0
        %v429 = vsel %vm385, %v344, 0
        %v432 = vsel %vm385, %v345, 0
        %434 = vmatprep.subr.bf16.mxu0 0
        %435 = vmatpush1.bf16.msra.mxu0 %v377
        %436 = vmatprep.subr.bf16.mxu0 0
        %437 = vmatpush1.bf16.msra.mxu0 %v378
        %438 = vmatprep.subr.bf16.mxu0 0
        %439 = vmatpush1.bf16.msra.mxu0 %v379
        %440 = vmatprep.subr.bf16.mxu0 0
        %441 = vmatpush1.bf16.msra.mxu0 %v380
        %442 = vmatprep.subr.bf16.mxu0 0
        %443 = vmatpush1.bf16.msra.mxu0 0
        %444 = vmatprep.subr.bf16.mxu0 0
        %445 = vmatpush1.bf16.msra.mxu0 0
        %446 = vmatprep.subr.bf16.mxu0 0
        %447 = vmatpush1.bf16.msra.mxu0 0
        %448 = vmatprep.subr.bf16.mxu0 0
        %449 = vmatpush1.bf16.msra.mxu0 0
        %450 = vmatprep.subr.bf16.mxu0 0
        %451 = vmatpush1.bf16.msra.mxu0 0
        %452 = vmatprep.subr.bf16.mxu0 0
        %453 = vmatpush1.bf16.msra.mxu0 0
        %454 = vmatprep.subr.bf16.mxu0 0
        %455 = vmatpush1.bf16.msra.mxu0 0
        %456 = vmatprep.subr.bf16.mxu0 0
        %457 = vmatpush1.bf16.msra.mxu0 0
        %458 = vmatprep.subr.bf16.mxu0 0
        %459 = vmatpush1.bf16.msra.mxu0 0
        %460 = vmatprep.subr.bf16.mxu0 0
        %461 = vmatpush1.bf16.msra.mxu0 0
        %462 = vmatprep.subr.bf16.mxu0 0
        %463 = vmatpush1.bf16.msra.mxu0 0
        %464 = vmatprep.subr.bf16.mxu0 0
        %465 = vmatpush1.bf16.msra.mxu0 0
        %466 = vmatprep.mubr.bf16.mxu0 0
        %467 = vmatmul.mubr.bf16.gmra.mrb[0].mxu0 %v387
        %v468 = vpop.f32.mrb[0].mxu0
        %v469 = vadd.f32 %v359, %v468
        %v470 = vpop.f32.mrb[0].mxu0
        %v471 = vpop.f32.mrb[0].mxu0
        %v472 = vadd.f32 %v359, %v471
        %v473 = vpop.f32.mrb[0].mxu0
        %474 = vmatprep.mubr.bf16.mxu0 0
        %475 = vmatmul.mubr.bf16.gmra.mrb[0].mxu0 %v390
        %v476 = vpop.f32.mrb[0].mxu0
        %v477 = vadd.f32 %v359, %v476
        %v478 = vpop.f32.mrb[0].mxu0
        %v479 = vpop.f32.mrb[0].mxu0
        %v480 = vadd.f32 %v359, %v479
        %v481 = vpop.f32.mrb[0].mxu0
        %482 = vmatprep.mubr.bf16.mxu0 0
        %483 = vmatmul.mubr.bf16.gmra.mrb[0].mxu0 %v393
        %v484 = vpop.f32.mrb[0].mxu0
        %v485 = vadd.f32 %v359, %v484
        %v486 = vpop.f32.mrb[0].mxu0
        %v487 = vpop.f32.mrb[0].mxu0
        %v488 = vadd.f32 %v359, %v487
        %v489 = vpop.f32.mrb[0].mxu0
        %490 = vmatprep.mubr.bf16.mxu0 0
        %491 = vmatmul.mubr.bf16.gmra.mrb[0].mxu0 %v396
        %v492 = vpop.f32.mrb[0].mxu0
        %v493 = vadd.f32 %v359, %v492
        %v494 = vpop.f32.mrb[0].mxu0
        %v495 = vpop.f32.mrb[0].mxu0
        %v496 = vadd.f32 %v359, %v495
        %v497 = vpop.f32.mrb[0].mxu0
        %498 = vmatprep.mubr.bf16.mxu0 0
        %499 = vmatmul.mubr.bf16.gmra.mrb[0].mxu0 %v399
        %v500 = vpop.f32.mrb[0].mxu0
        %v501 = vadd.f32 %v359, %v500
        %v502 = vpop.f32.mrb[0].mxu0
        %v503 = vpop.f32.mrb[0].mxu0
        %v504 = vadd.f32 %v359, %v503
        %v505 = vpop.f32.mrb[0].mxu0
        %506 = vmatprep.mubr.bf16.mxu0 0
        %507 = vmatmul.mubr.bf16.gmra.mrb[0].mxu0 %v402
        %v508 = vpop.f32.mrb[0].mxu0
        %v509 = vadd.f32 %v359, %v508
        %v510 = vpop.f32.mrb[0].mxu0
        %v511 = vpop.f32.mrb[0].mxu0
        %v512 = vadd.f32 %v359, %v511
        %v513 = vpop.f32.mrb[0].mxu0
        %514 = vmatprep.mubr.bf16.mxu0 0
        %515 = vmatmul.mubr.bf16.gmra.mrb[0].mxu0 %v405
        %v516 = vpop.f32.mrb[0].mxu0
        %v517 = vadd.f32 %v359, %v516
        %v518 = vpop.f32.mrb[0].mxu0
        %v519 = vpop.f32.mrb[0].mxu0
        %v520 = vadd.f32 %v359, %v519
        %v521 = vpop.f32.mrb[0].mxu0
        %522 = vmatprep.mubr.bf16.mxu0 0
        %523 = vmatmul.mubr.bf16.gmra.mrb[0].mxu0 %v408
        %v524 = vpop.f32.mrb[0].mxu0
        %v525 = vadd.f32 %v359, %v524
        %v526 = vpop.f32.mrb[0].mxu0
        %v527 = vpop.f32.mrb[0].mxu0
        %v528 = vadd.f32 %v359, %v527
        %v529 = vpop.f32.mrb[0].mxu0
        %530 = vmatprep.mubr.bf16.mxu0 0
        %531 = vmatmul.mubr.bf16.gmra.mrb[0].mxu0 %v411
        %v532 = vpop.f32.mrb[0].mxu0
        %v533 = vadd.f32 %v359, %v532
        %v534 = vpop.f32.mrb[0].mxu0
        %v535 = vpop.f32.mrb[0].mxu0
        %v536 = vadd.f32 %v359, %v535
        %v537 = vpop.f32.mrb[0].mxu0
        %538 = vmatprep.mubr.bf16.mxu0 0
        %539 = vmatmul.mubr.bf16.gmra.mrb[0].mxu0 %v414
        %v540 = vpop.f32.mrb[0].mxu0
        %v541 = vadd.f32 %v359, %v540
        %v542 = vpop.f32.mrb[0].mxu0
        %v543 = vpop.f32.mrb[0].mxu0
        %v544 = vadd.f32 %v359, %v543
        %v545 = vpop.f32.mrb[0].mxu0
        %546 = vmatprep.mubr.bf16.mxu0 0
        %547 = vmatmul.mubr.bf16.gmra.mrb[0].mxu0 %v417
        %v548 = vpop.f32.mrb[0].mxu0
        %v549 = vadd.f32 %v359, %v548
        %v550 = vpop.f32.mrb[0].mxu0
        %v551 = vpop.f32.mrb[0].mxu0
        %v552 = vadd.f32 %v359, %v551
        %v553 = vpop.f32.mrb[0].mxu0
        %554 = vmatprep.mubr.bf16.mxu0 0
        %555 = vmatmul.mubr.bf16.gmra.mrb[0].mxu0 %v420
        %v556 = vpop.f32.mrb[0].mxu0
        %v557 = vadd.f32 %v359, %v556
        %v558 = vpop.f32.mrb[0].mxu0
        %v559 = vpop.f32.mrb[0].mxu0
        %v560 = vadd.f32 %v359, %v559
        %v561 = vpop.f32.mrb[0].mxu0
        %562 = vmatprep.mubr.bf16.mxu0 0
        %563 = vmatmul.mubr.bf16.gmra.mrb[0].mxu0 %v423
        %v564 = vpop.f32.mrb[0].mxu0
        %v565 = vadd.f32 %v359, %v564
        %v566 = vpop.f32.mrb[0].mxu0
        %v567 = vpop.f32.mrb[0].mxu0
        %v568 = vadd.f32 %v359, %v567
        %v569 = vpop.f32.mrb[0].mxu0
        %570 = vmatprep.mubr.bf16.mxu0 0
        %571 = vmatmul.mubr.bf16.gmra.mrb[0].mxu0 %v426
        %v572 = vpop.f32.mrb[0].mxu0
        %v573 = vadd.f32 %v359, %v572
        %v574 = vpop.f32.mrb[0].mxu0
        %v575 = vpop.f32.mrb[0].mxu0
        %v576 = vadd.f32 %v359, %v575
        %v577 = vpop.f32.mrb[0].mxu0
        %578 = vmatprep.mubr.bf16.mxu0 0
        %579 = vmatmul.mubr.bf16.gmra.mrb[0].mxu0 %v429
        %v580 = vpop.f32.mrb[0].mxu0
        %v581 = vadd.f32 %v359, %v580
        %v582 = vpop.f32.mrb[0].mxu0
        %v583 = vpop.f32.mrb[0].mxu0
        %v584 = vadd.f32 %v359, %v583
        %v585 = vpop.f32.mrb[0].mxu0
        %586 = vmatprep.mubr.bf16.mxu0 0
        %587 = vmatmul.mubr.bf16.gmra.mrb[0].mxu0 %v432
        %v588 = vpop.f32.mrb[0].mxu0
        %v589 = vadd.f32 %v359, %v588
        %v590 = vpop.f32.mrb[0].mxu0
        %v591 = vpop.f32.mrb[0].mxu0
        %v592 = vadd.f32 %v359, %v591
        %v593 = vpop.f32.mrb[0].mxu0
        %594 = vdwg.mxu0
        %v595 = vmax.f32 %v469, 0.0
        %v596 = vmax.f32 %v472, 0.0
        %v597 = vmax.f32 %v477, 0.0
        %v598 = vmax.f32 %v480, 0.0
        %v599 = vmax.f32 %v485, 0.0
        %v600 = vmax.f32 %v488, 0.0
        %v601 = vmax.f32 %v493, 0.0
        %v602 = vmax.f32 %v496, 0.0
        %v603 = vmax.f32 %v501, 0.0
        %v604 = vmax.f32 %v504, 0.0
        %v605 = vmax.f32 %v509, 0.0
        %v606 = vmax.f32 %v512, 0.0
        %v607 = vmax.f32 %v517, 0.0
        %v608 = vmax.f32 %v520, 0.0
        %v609 = vmax.f32 %v525, 0.0
        %v610 = vmax.f32 %v528, 0.0
        %v611 = vmax.f32 %v533, 0.0
        %v612 = vmax.f32 %v536, 0.0
        %v613 = vmax.f32 %v541, 0.0
        %v614 = vmax.f32 %v544, 0.0
        %v615 = vmax.f32 %v549, 0.0
        %v616 = vmax.f32 %v552, 0.0
        %v617 = vmax.f32 %v557, 0.0
        %v618 = vmax.f32 %v560, 0.0
        %v619 = vmax.f32 %v565, 0.0
        %v620 = vmax.f32 %v568, 0.0
        %v621 = vmax.f32 %v573, 0.0
        %v622 = vmax.f32 %v576, 0.0
        %v623 = vmax.f32 %v581, 0.0
        %v624 = vmax.f32 %v584, 0.0
        %v625 = vmax.f32 %v589, 0.0
        %v626 = vmax.f32 %v592, 0.0
        %vm627 = vcmask 130048
        %628 = vst.msk [vmem:[#allocation2] sm:$0xff] %vm627, 0.0
        %629 = vst.msk [vmem:[#allocation2 + $0x8] sm:$0xff] %vm627, 0.0
        %vm630 = vcmask 123904
        %631 = vst.msk [vmem:[#allocation2 + $0x10] sm:$0x3] %vm630, 0.0
        %s632 = scalar_lea.vmem [#allocation2], 408
        %633 = vst.msk [vmem:[%s632] sm:$0xff] %vm627, 0.0
        %634 = vst.msk [vmem:[%s632 + $0x8] sm:$0xff] %vm627, 0.0
        %635 = vst.msk [vmem:[%s632 + $0x10] sm:$0x3] %vm630, 0.0
        %vm668 = vcmask 1040384
        %v669 = vrot.slane %v595, 7
        %v670 = vrot.slane %v596, 7
        %v671 = vsel %vm668, %v669, %v670
        %v672 = vrot.slane %v597, 7
        %v673 = vrot.slane %v598, 7
        %v674 = vsel %vm668, %v672, %v673
        %v675 = vrot.slane %v599, 7
        %v676 = vrot.slane %v600, 7
        %v677 = vsel %vm668, %v675, %v676
        %v678 = vrot.slane %v601, 7
        %v679 = vrot.slane %v602, 7
        %v680 = vsel %vm668, %v678, %v679
        %v681 = vrot.slane %v603, 7
        %v682 = vrot.slane %v604, 7
        %v683 = vsel %vm668, %v681, %v682
        %v684 = vrot.slane %v605, 7
        %v685 = vrot.slane %v606, 7
        %v686 = vsel %vm668, %v684, %v685
        %v687 = vrot.slane %v607, 7
        %v688 = vrot.slane %v608, 7
        %v689 = vsel %vm668, %v687, %v688
        %v690 = vrot.slane %v609, 7
        %v691 = vrot.slane %v610, 7
        %v692 = vsel %vm668, %v690, %v691
        %v693 = vrot.slane %v611, 7
        %v694 = vrot.slane %v612, 7
        %v695 = vsel %vm668, %v693, %v694
        %v696 = vrot.slane %v613, 7
        %v697 = vrot.slane %v614, 7
        %v698 = vsel %vm668, %v696, %v697
        %v699 = vrot.slane %v615, 7
        %v700 = vrot.slane %v616, 7
        %v701 = vsel %vm668, %v699, %v700
        %v702 = vrot.slane %v617, 7
        %v703 = vrot.slane %v618, 7
        %v704 = vsel %vm668, %v702, %v703
        %v705 = vrot.slane %v619, 7
        %v706 = vrot.slane %v620, 7
        %v707 = vsel %vm668, %v705, %v706
        %v708 = vrot.slane %v621, 7
        %v709 = vrot.slane %v622, 7
        %v710 = vsel %vm668, %v708, %v709
        %v711 = vrot.slane %v623, 7
        %v712 = vrot.slane %v624, 7
        %v713 = vsel %vm668, %v711, %v712
        %v714 = vrot.slane %v625, 7
        %v715 = vrot.slane %v626, 7
        %v716 = vsel %vm668, %v714, %v715
        %v765 = vsel %vm668, 0.0, %v669
        %v766 = vsel %vm668, 0.0, %v672
        %v767 = vsel %vm668, 0.0, %v675
        %v768 = vsel %vm668, 0.0, %v678
        %v769 = vsel %vm668, 0.0, %v681
        %v770 = vsel %vm668, 0.0, %v684
        %v771 = vsel %vm668, 0.0, %v687
        %v772 = vsel %vm668, 0.0, %v690
        %v773 = vsel %vm668, 0.0, %v693
        %v774 = vsel %vm668, 0.0, %v696
        %v775 = vsel %vm668, 0.0, %v699
        %v776 = vsel %vm668, 0.0, %v702
        %v777 = vsel %vm668, 0.0, %v705
        %v778 = vsel %vm668, 0.0, %v708
        %v779 = vsel %vm668, 0.0, %v711
        %v780 = vsel %vm668, 0.0, %v714
        %v781 = vsel %vm668, %v670, 0.0
        %v782 = vsel %vm668, %v673, 0.0
        %v783 = vsel %vm668, %v676, 0.0
        %v784 = vsel %vm668, %v679, 0.0
        %v785 = vsel %vm668, %v682, 0.0
        %v786 = vsel %vm668, %v685, 0.0
        %v787 = vsel %vm668, %v688, 0.0
        %v788 = vsel %vm668, %v691, 0.0
        %v789 = vsel %vm668, %v694, 0.0
        %v790 = vsel %vm668, %v697, 0.0
        %v791 = vsel %vm668, %v700, 0.0
        %v792 = vsel %vm668, %v703, 0.0
        %v793 = vsel %vm668, %v706, 0.0
        %v794 = vsel %vm668, %v709, 0.0
        %v795 = vsel %vm668, %v712, 0.0
        %v796 = vsel %vm668, %v715, 0.0
        %s797 = scalar_lea.vmem [#allocation2], 24
        %798 = vst.msk [vmem:[%s797] sm:$0xff] %vm627, %v765
        %799 = vst.msk [vmem:[%s797 + $0x8] sm:$0xff] %vm627, %v671
        %800 = vst.msk [vmem:[%s797 + $0x10] sm:$0x3] %vm630, %v781
        %801 = vst.msk [vmem:[%s797 + $0x18] sm:$0xff] %vm627, %v766
        %802 = vst.msk [vmem:[%s797 + $0x20] sm:$0xff] %vm627, %v674
        %803 = vst.msk [vmem:[%s797 + $0x28] sm:$0x3] %vm630, %v782
        %804 = vst.msk [vmem:[%s797 + $0x30] sm:$0xff] %vm627, %v767
        %805 = vst.msk [vmem:[%s797 + $0x38] sm:$0xff] %vm627, %v677
        %806 = vst.msk [vmem:[%s797 + $0x40] sm:$0x3] %vm630, %v783
        %807 = vst.msk [vmem:[%s797 + $0x48] sm:$0xff] %vm627, %v768
        %808 = vst.msk [vmem:[%s797 + $0x50] sm:$0xff] %vm627, %v680
        %809 = vst.msk [vmem:[%s797 + $0x58] sm:$0x3] %vm630, %v784
        %810 = vst.msk [vmem:[%s797 + $0x60] sm:$0xff] %vm627, %v769
        %811 = vst.msk [vmem:[%s797 + $0x68] sm:$0xff] %vm627, %v683
        %812 = vst.msk [vmem:[%s797 + $0x70] sm:$0x3] %vm630, %v785
        %813 = vst.msk [vmem:[%s797 + $0x78] sm:$0xff] %vm627, %v770
        %814 = vst.msk [vmem:[%s797 + $0x80] sm:$0xff] %vm627, %v686
        %815 = vst.msk [vmem:[%s797 + $0x88] sm:$0x3] %vm630, %v786
        %816 = vst.msk [vmem:[%s797 + $0x90] sm:$0xff] %vm627, %v771
        %817 = vst.msk [vmem:[%s797 + $0x98] sm:$0xff] %vm627, %v689
        %818 = vst.msk [vmem:[%s797 + $0xa0] sm:$0x3] %vm630, %v787
        %819 = vst.msk [vmem:[%s797 + $0xa8] sm:$0xff] %vm627, %v772
        %820 = vst.msk [vmem:[%s797 + $0xb0] sm:$0xff] %vm627, %v692
        %821 = vst.msk [vmem:[%s797 + $0xb8] sm:$0x3] %vm630, %v788
        %822 = vst.msk [vmem:[%s797 + $0xc0] sm:$0xff] %vm627, %v773
        %823 = vst.msk [vmem:[%s797 + $0xc8] sm:$0xff] %vm627, %v695
        %824 = vst.msk [vmem:[%s797 + $0xd0] sm:$0x3] %vm630, %v789
        %825 = vst.msk [vmem:[%s797 + $0xd8] sm:$0xff] %vm627, %v774
        %826 = vst.msk [vmem:[%s797 + $0xe0] sm:$0xff] %vm627, %v698
        %827 = vst.msk [vmem:[%s797 + $0xe8] sm:$0x3] %vm630, %v790
        %828 = vst.msk [vmem:[%s797 + $0xf0] sm:$0xff] %vm627, %v775
        %829 = vst.msk [vmem:[%s797 + $0xf8] sm:$0xff] %vm627, %v701
        %830 = vst.msk [vmem:[%s797 + $0x100] sm:$0x3] %vm630, %v791
        %831 = vst.msk [vmem:[%s797 + $0x108] sm:$0xff] %vm627, %v776
        %832 = vst.msk [vmem:[%s797 + $0x110] sm:$0xff] %vm627, %v704
        %833 = vst.msk [vmem:[%s797 + $0x118] sm:$0x3] %vm630, %v792
        %834 = vst.msk [vmem:[%s797 + $0x120] sm:$0xff] %vm627, %v777
        %835 = vst.msk [vmem:[%s797 + $0x128] sm:$0xff] %vm627, %v707
        %836 = vst.msk [vmem:[%s797 + $0x130] sm:$0x3] %vm630, %v793
        %837 = vst.msk [vmem:[%s797 + $0x138] sm:$0xff] %vm627, %v778
        %838 = vst.msk [vmem:[%s797 + $0x140] sm:$0xff] %vm627, %v710
        %839 = vst.msk [vmem:[%s797 + $0x148] sm:$0x3] %vm630, %v794
        %840 = vst.msk [vmem:[%s797 + $0x150] sm:$0xff] %vm627, %v779
        %841 = vst.msk [vmem:[%s797 + $0x158] sm:$0xff] %vm627, %v713
        %842 = vst.msk [vmem:[%s797 + $0x160] sm:$0x3] %vm630, %v795
        %843 = vst.msk [vmem:[%s797 + $0x168] sm:$0xff] %vm627, %v780
        %844 = vst.msk [vmem:[%s797 + $0x170] sm:$0xff] %vm627, %v716
        %845 = vst.msk [vmem:[%s797 + $0x178] sm:$0x3] %vm630, %v796
        %v846 = vld [vmem:[#allocation2] sm:$0xff]
        %v847 = vld [vmem:[#allocation2 + $0x8] sm:$0xff]
        %v848 = vld [vmem:[#allocation2 + $0x18] sm:$0xff]
        %v849 = vld [vmem:[#allocation2 + $0x20] sm:$0xff]
        %v850 = vld [vmem:[#allocation2 + $0x30] sm:$0xff]
        %v851 = vld [vmem:[#allocation2 + $0x38] sm:$0xff]
        %v852 = vld [vmem:[#allocation2 + $0x48] sm:$0xff]
        %v853 = vld [vmem:[#allocation2 + $0x50] sm:$0xff]
        %v854 = vld [vmem:[#allocation2 + $0x60] sm:$0xff]
        %v855 = vld [vmem:[#allocation2 + $0x68] sm:$0xff]
        %v856 = vld [vmem:[#allocation2 + $0x78] sm:$0xff]
        %v857 = vld [vmem:[#allocation2 + $0x80] sm:$0xff]
        %v858 = vld [vmem:[#allocation2 + $0x90] sm:$0xff]
        %v859 = vld [vmem:[#allocation2 + $0x98] sm:$0xff]
        %v860 = vld [vmem:[#allocation2 + $0xa8] sm:$0xff]
        %v861 = vld [vmem:[#allocation2 + $0xb0] sm:$0xff]
        %v862 = vld [vmem:[#allocation2 + $0xc0] sm:$0xff]
        %v863 = vld [vmem:[#allocation2 + $0xc8] sm:$0xff]
        %v864 = vld [vmem:[#allocation2 + $0xd8] sm:$0xff]
        %v865 = vld [vmem:[#allocation2 + $0xe0] sm:$0xff]
        %v866 = vld [vmem:[#allocation2 + $0xf0] sm:$0xff]
        %v867 = vld [vmem:[#allocation2 + $0xf8] sm:$0xff]
        %v868 = vld [vmem:[#allocation2 + $0x108] sm:$0xff]
        %v869 = vld [vmem:[#allocation2 + $0x110] sm:$0xff]
        %v870 = vld [vmem:[#allocation2 + $0x120] sm:$0xff]
        %v871 = vld [vmem:[#allocation2 + $0x128] sm:$0xff]
        %v872 = vld [vmem:[#allocation2 + $0x138] sm:$0xff]
        %v873 = vld [vmem:[#allocation2 + $0x140] sm:$0xff]
        %v874 = vld [vmem:[#allocation2 + $0x150] sm:$0xff]
        %v875 = vld [vmem:[#allocation2 + $0x158] sm:$0xff]
        %v876 = vld [vmem:[#allocation2 + $0x168] sm:$0xff]
        %v877 = vld [vmem:[#allocation2 + $0x170] sm:$0xff]
        %v878 = vld [vmem:[#allocation2 + $0x1] sm:$0xff]
        %v879 = vld [vmem:[#allocation2 + $0x9] sm:$0xff]
        %v880 = vld [vmem:[#allocation2 + $0x19] sm:$0xff]
        %v881 = vld [vmem:[#allocation2 + $0x21] sm:$0xff]
        %v882 = vld [vmem:[#allocation2 + $0x31] sm:$0xff]
        %v883 = vld [vmem:[#allocation2 + $0x39] sm:$0xff]
        %v884 = vld [vmem:[#allocation2 + $0x49] sm:$0xff]
        %v885 = vld [vmem:[#allocation2 + $0x51] sm:$0xff]
        %v886 = vld [vmem:[#allocation2 + $0x61] sm:$0xff]
        %v887 = vld [vmem:[#allocation2 + $0x69] sm:$0xff]
        %v888 = vld [vmem:[#allocation2 + $0x79] sm:$0xff]
        %v889 = vld [vmem:[#allocation2 + $0x81] sm:$0xff]
        %v890 = vld [vmem:[#allocation2 + $0x91] sm:$0xff]
        %v891 = vld [vmem:[#allocation2 + $0x99] sm:$0xff]
        %v892 = vld [vmem:[#allocation2 + $0xa9] sm:$0xff]
        %v893 = vld [vmem:[#allocation2 + $0xb1] sm:$0xff]
        %v894 = vld [vmem:[#allocation2 + $0xc1] sm:$0xff]
        %v895 = vld [vmem:[#allocation2 + $0xc9] sm:$0xff]
        %v896 = vld [vmem:[#allocation2 + $0xd9] sm:$0xff]
        %v897 = vld [vmem:[#allocation2 + $0xe1] sm:$0xff]
        %v898 = vld [vmem:[#allocation2 + $0xf1] sm:$0xff]
        %v899 = vld [vmem:[#allocation2 + $0xf9] sm:$0xff]
        %v900 = vld [vmem:[#allocation2 + $0x109] sm:$0xff]
        %v901 = vld [vmem:[#allocation2 + $0x111] sm:$0xff]
        %v902 = vld [vmem:[#allocation2 + $0x121] sm:$0xff]
        %v903 = vld [vmem:[#allocation2 + $0x129] sm:$0xff]
        %v904 = vld [vmem:[#allocation2 + $0x139] sm:$0xff]
        %v905 = vld [vmem:[#allocation2 + $0x141] sm:$0xff]
        %v906 = vld [vmem:[#allocation2 + $0x151] sm:$0xff]
        %v907 = vld [vmem:[#allocation2 + $0x159] sm:$0xff]
        %v908 = vld [vmem:[#allocation2 + $0x169] sm:$0xff]
        %v909 = vld [vmem:[#allocation2 + $0x171] sm:$0xff]
        %v910 = vld [vmem:[#allocation2 + $0x2] sm:$0xff]
        %v911 = vld [vmem:[#allocation2 + $0xa] sm:$0xff]
        %v912 = vld [vmem:[#allocation2 + $0x1a] sm:$0xff]
        %v913 = vld [vmem:[#allocation2 + $0x22] sm:$0xff]
        %v914 = vld [vmem:[#allocation2 + $0x32] sm:$0xff]
        %v915 = vld [vmem:[#allocation2 + $0x3a] sm:$0xff]
        %v916 = vld [vmem:[#allocation2 + $0x4a] sm:$0xff]
        %v917 = vld [vmem:[#allocation2 + $0x52] sm:$0xff]
        %v918 = vld [vmem:[#allocation2 + $0x62] sm:$0xff]
        %v919 = vld [vmem:[#allocation2 + $0x6a] sm:$0xff]
        %v920 = vld [vmem:[#allocation2 + $0x7a] sm:$0xff]
        %v921 = vld [vmem:[#allocation2 + $0x82] sm:$0xff]
        %v922 = vld [vmem:[#allocation2 + $0x92] sm:$0xff]
        %v923 = vld [vmem:[#allocation2 + $0x9a] sm:$0xff]
        %v924 = vld [vmem:[#allocation2 + $0xaa] sm:$0xff]
        %v925 = vld [vmem:[#allocation2 + $0xb2] sm:$0xff]
        %v926 = vld [vmem:[#allocation2 + $0xc2] sm:$0xff]
        %v927 = vld [vmem:[#allocation2 + $0xca] sm:$0xff]
        %v928 = vld [vmem:[#allocation2 + $0xda] sm:$0xff]
        %v929 = vld [vmem:[#allocation2 + $0xe2] sm:$0xff]
        %v930 = vld [vmem:[#allocation2 + $0xf2] sm:$0xff]
        %v931 = vld [vmem:[#allocation2 + $0xfa] sm:$0xff]
        %v932 = vld [vmem:[#allocation2 + $0x10a] sm:$0xff]
        %v933 = vld [vmem:[#allocation2 + $0x112] sm:$0xff]
        %v934 = vld [vmem:[#allocation2 + $0x122] sm:$0xff]
        %v935 = vld [vmem:[#allocation2 + $0x12a] sm:$0xff]
        %v936 = vld [vmem:[#allocation2 + $0x13a] sm:$0xff]
        %v937 = vld [vmem:[#allocation2 + $0x142] sm:$0xff]
        %v938 = vld [vmem:[#allocation2 + $0x152] sm:$0xff]
        %v939 = vld [vmem:[#allocation2 + $0x15a] sm:$0xff]
        %v940 = vld [vmem:[#allocation2 + $0x16a] sm:$0xff]
        %v941 = vld [vmem:[#allocation2 + $0x172] sm:$0xff]
        %v942 = vld [vmem:[%s797] sm:$0xff]
        %v943 = vld [vmem:[%s797 + $0x8] sm:$0xff]
        %v944 = vld [vmem:[%s797 + $0x18] sm:$0xff]
        %v945 = vld [vmem:[%s797 + $0x20] sm:$0xff]
        %v946 = vld [vmem:[%s797 + $0x30] sm:$0xff]
        %v947 = vld [vmem:[%s797 + $0x38] sm:$0xff]
        %v948 = vld [vmem:[%s797 + $0x48] sm:$0xff]
        %v949 = vld [vmem:[%s797 + $0x50] sm:$0xff]
        %v950 = vld [vmem:[%s797 + $0x60] sm:$0xff]
        %v951 = vld [vmem:[%s797 + $0x68] sm:$0xff]
        %v952 = vld [vmem:[%s797 + $0x78] sm:$0xff]
        %v953 = vld [vmem:[%s797 + $0x80] sm:$0xff]
        %v954 = vld [vmem:[%s797 + $0x90] sm:$0xff]
        %v955 = vld [vmem:[%s797 + $0x98] sm:$0xff]
        %v956 = vld [vmem:[%s797 + $0xa8] sm:$0xff]
        %v957 = vld [vmem:[%s797 + $0xb0] sm:$0xff]
        %v958 = vld [vmem:[%s797 + $0xc0] sm:$0xff]
        %v959 = vld [vmem:[%s797 + $0xc8] sm:$0xff]
        %v960 = vld [vmem:[%s797 + $0xd8] sm:$0xff]
        %v961 = vld [vmem:[%s797 + $0xe0] sm:$0xff]
        %v962 = vld [vmem:[%s797 + $0xf0] sm:$0xff]
        %v963 = vld [vmem:[%s797 + $0xf8] sm:$0xff]
        %v964 = vld [vmem:[%s797 + $0x108] sm:$0xff]
        %v965 = vld [vmem:[%s797 + $0x110] sm:$0xff]
        %v966 = vld [vmem:[%s797 + $0x120] sm:$0xff]
        %v967 = vld [vmem:[%s797 + $0x128] sm:$0xff]
        %v968 = vld [vmem:[%s797 + $0x138] sm:$0xff]
        %v969 = vld [vmem:[%s797 + $0x140] sm:$0xff]
        %v970 = vld [vmem:[%s797 + $0x150] sm:$0xff]
        %v971 = vld [vmem:[%s797 + $0x158] sm:$0xff]
        %v972 = vld [vmem:[%s797 + $0x168] sm:$0xff]
        %v973 = vld [vmem:[%s797 + $0x170] sm:$0xff]
        %v974 = vld [vmem:[%s797 + $0x1] sm:$0xff]
        %v975 = vld [vmem:[%s797 + $0x9] sm:$0xff]
        %v976 = vld [vmem:[%s797 + $0x19] sm:$0xff]
        %v977 = vld [vmem:[%s797 + $0x21] sm:$0xff]
        %v978 = vld [vmem:[%s797 + $0x31] sm:$0xff]
        %v979 = vld [vmem:[%s797 + $0x39] sm:$0xff]
        %v980 = vld [vmem:[%s797 + $0x49] sm:$0xff]
        %v981 = vld [vmem:[%s797 + $0x51] sm:$0xff]
        %v982 = vld [vmem:[%s797 + $0x61] sm:$0xff]
        %v983 = vld [vmem:[%s797 + $0x69] sm:$0xff]
        %v984 = vld [vmem:[%s797 + $0x79] sm:$0xff]
        %v985 = vld [vmem:[%s797 + $0x81] sm:$0xff]
        %v986 = vld [vmem:[%s797 + $0x91] sm:$0xff]
        %v987 = vld [vmem:[%s797 + $0x99] sm:$0xff]
        %v988 = vld [vmem:[%s797 + $0xa9] sm:$0xff]
        %v989 = vld [vmem:[%s797 + $0xb1] sm:$0xff]
        %v990 = vld [vmem:[%s797 + $0xc1] sm:$0xff]
        %v991 = vld [vmem:[%s797 + $0xc9] sm:$0xff]
        %v992 = vld [vmem:[%s797 + $0xd9] sm:$0xff]
        %v993 = vld [vmem:[%s797 + $0xe1] sm:$0xff]
        %v994 = vld [vmem:[%s797 + $0xf1] sm:$0xff]
        %v995 = vld [vmem:[%s797 + $0xf9] sm:$0xff]
        %v996 = vld [vmem:[%s797 + $0x109] sm:$0xff]
        %v997 = vld [vmem:[%s797 + $0x111] sm:$0xff]
        %v998 = vld [vmem:[%s797 + $0x121] sm:$0xff]
        %v999 = vld [vmem:[%s797 + $0x129] sm:$0xff]
        %v1000 = vld [vmem:[%s797 + $0x139] sm:$0xff]
        %v1001 = vld [vmem:[%s797 + $0x141] sm:$0xff]
        %v1002 = vld [vmem:[%s797 + $0x151] sm:$0xff]
        %v1003 = vld [vmem:[%s797 + $0x159] sm:$0xff]
        %v1004 = vld [vmem:[%s797 + $0x169] sm:$0xff]
        %v1005 = vld [vmem:[%s797 + $0x171] sm:$0xff]
        %v1006 = vld [vmem:[%s797 + $0x2] sm:$0xff]
        %v1007 = vld [vmem:[%s797 + $0xa] sm:$0xff]
        %v1008 = vld [vmem:[%s797 + $0x1a] sm:$0xff]
        %v1009 = vld [vmem:[%s797 + $0x22] sm:$0xff]
        %v1010 = vld [vmem:[%s797 + $0x32] sm:$0xff]
        %v1011 = vld [vmem:[%s797 + $0x3a] sm:$0xff]
        %v1012 = vld [vmem:[%s797 + $0x4a] sm:$0xff]
        %v1013 = vld [vmem:[%s797 + $0x52] sm:$0xff]
        %v1014 = vld [vmem:[%s797 + $0x62] sm:$0xff]
        %v1015 = vld [vmem:[%s797 + $0x6a] sm:$0xff]
        %v1016 = vld [vmem:[%s797 + $0x7a] sm:$0xff]
        %v1017 = vld [vmem:[%s797 + $0x82] sm:$0xff]
        %v1018 = vld [vmem:[%s797 + $0x92] sm:$0xff]
        %v1019 = vld [vmem:[%s797 + $0x9a] sm:$0xff]
        %v1020 = vld [vmem:[%s797 + $0xaa] sm:$0xff]
        %v1021 = vld [vmem:[%s797 + $0xb2] sm:$0xff]
        %v1022 = vld [vmem:[%s797 + $0xc2] sm:$0xff]
        %v1023 = vld [vmem:[%s797 + $0xca] sm:$0xff]
        %v1024 = vld [vmem:[%s797 + $0xda] sm:$0xff]
        %v1025 = vld [vmem:[%s797 + $0xe2] sm:$0xff]
        %v1026 = vld [vmem:[%s797 + $0xf2] sm:$0xff]
        %v1027 = vld [vmem:[%s797 + $0xfa] sm:$0xff]
        %v1028 = vld [vmem:[%s797 + $0x10a] sm:$0xff]
        %v1029 = vld [vmem:[%s797 + $0x112] sm:$0xff]
        %v1030 = vld [vmem:[%s797 + $0x122] sm:$0xff]
        %v1031 = vld [vmem:[%s797 + $0x12a] sm:$0xff]
        %v1032 = vld [vmem:[%s797 + $0x13a] sm:$0xff]
        %v1033 = vld [vmem:[%s797 + $0x142] sm:$0xff]
        %v1034 = vld [vmem:[%s797 + $0x152] sm:$0xff]
        %v1035 = vld [vmem:[%s797 + $0x15a] sm:$0xff]
        %v1036 = vld [vmem:[%s797 + $0x16a] sm:$0xff]
        %v1037 = vld [vmem:[%s797 + $0x172] sm:$0xff]
        %s1038 = scalar_lea.vmem [#allocation2], 48
        %v1039 = vld [vmem:[%s1038] sm:$0xff]
        %v1040 = vld [vmem:[%s1038 + $0x8] sm:$0xff]
        %v1041 = vld [vmem:[%s1038 + $0x18] sm:$0xff]
        %v1042 = vld [vmem:[%s1038 + $0x20] sm:$0xff]
        %v1043 = vld [vmem:[%s1038 + $0x30] sm:$0xff]
        %v1044 = vld [vmem:[%s1038 + $0x38] sm:$0xff]
        %v1045 = vld [vmem:[%s1038 + $0x48] sm:$0xff]
        %v1046 = vld [vmem:[%s1038 + $0x50] sm:$0xff]
        %v1047 = vld [vmem:[%s1038 + $0x60] sm:$0xff]
        %v1048 = vld [vmem:[%s1038 + $0x68] sm:$0xff]
        %v1049 = vld [vmem:[%s1038 + $0x78] sm:$0xff]
        %v1050 = vld [vmem:[%s1038 + $0x80] sm:$0xff]
        %v1051 = vld [vmem:[%s1038 + $0x90] sm:$0xff]
        %v1052 = vld [vmem:[%s1038 + $0x98] sm:$0xff]
        %v1053 = vld [vmem:[%s1038 + $0xa8] sm:$0xff]
        %v1054 = vld [vmem:[%s1038 + $0xb0] sm:$0xff]
        %v1055 = vld [vmem:[%s1038 + $0xc0] sm:$0xff]
        %v1056 = vld [vmem:[%s1038 + $0xc8] sm:$0xff]
        %v1057 = vld [vmem:[%s1038 + $0xd8] sm:$0xff]
        %v1058 = vld [vmem:[%s1038 + $0xe0] sm:$0xff]
        %v1059 = vld [vmem:[%s1038 + $0xf0] sm:$0xff]
        %v1060 = vld [vmem:[%s1038 + $0xf8] sm:$0xff]
        %v1061 = vld [vmem:[%s1038 + $0x108] sm:$0xff]
        %v1062 = vld [vmem:[%s1038 + $0x110] sm:$0xff]
        %v1063 = vld [vmem:[%s1038 + $0x120] sm:$0xff]
        %v1064 = vld [vmem:[%s1038 + $0x128] sm:$0xff]
        %v1065 = vld [vmem:[%s1038 + $0x138] sm:$0xff]
        %v1066 = vld [vmem:[%s1038 + $0x140] sm:$0xff]
        %v1067 = vld [vmem:[%s1038 + $0x150] sm:$0xff]
        %v1068 = vld [vmem:[%s1038 + $0x158] sm:$0xff]
        %v1069 = vld [vmem:[%s1038 + $0x168] sm:$0xff]
        %v1070 = vld [vmem:[%s1038 + $0x170] sm:$0xff]
        %v1071 = vld [vmem:[%s1038 + $0x1] sm:$0xff]
        %v1072 = vld [vmem:[%s1038 + $0x9] sm:$0xff]
        %v1073 = vld [vmem:[%s1038 + $0x19] sm:$0xff]
        %v1074 = vld [vmem:[%s1038 + $0x21] sm:$0xff]
        %v1075 = vld [vmem:[%s1038 + $0x31] sm:$0xff]
        %v1076 = vld [vmem:[%s1038 + $0x39] sm:$0xff]
        %v1077 = vld [vmem:[%s1038 + $0x49] sm:$0xff]
        %v1078 = vld [vmem:[%s1038 + $0x51] sm:$0xff]
        %v1079 = vld [vmem:[%s1038 + $0x61] sm:$0xff]
        %v1080 = vld [vmem:[%s1038 + $0x69] sm:$0xff]
        %v1081 = vld [vmem:[%s1038 + $0x79] sm:$0xff]
        %v1082 = vld [vmem:[%s1038 + $0x81] sm:$0xff]
        %v1083 = vld [vmem:[%s1038 + $0x91] sm:$0xff]
        %v1084 = vld [vmem:[%s1038 + $0x99] sm:$0xff]
        %v1085 = vld [vmem:[%s1038 + $0xa9] sm:$0xff]
        %v1086 = vld [vmem:[%s1038 + $0xb1] sm:$0xff]
        %v1087 = vld [vmem:[%s1038 + $0xc1] sm:$0xff]
        %v1088 = vld [vmem:[%s1038 + $0xc9] sm:$0xff]
        %v1089 = vld [vmem:[%s1038 + $0xd9] sm:$0xff]
        %v1090 = vld [vmem:[%s1038 + $0xe1] sm:$0xff]
        %v1091 = vld [vmem:[%s1038 + $0xf1] sm:$0xff]
        %v1092 = vld [vmem:[%s1038 + $0xf9] sm:$0xff]
        %v1093 = vld [vmem:[%s1038 + $0x109] sm:$0xff]
        %v1094 = vld [vmem:[%s1038 + $0x111] sm:$0xff]
        %v1095 = vld [vmem:[%s1038 + $0x121] sm:$0xff]
        %v1096 = vld [vmem:[%s1038 + $0x129] sm:$0xff]
        %v1097 = vld [vmem:[%s1038 + $0x139] sm:$0xff]
        %v1098 = vld [vmem:[%s1038 + $0x141] sm:$0xff]
        %v1099 = vld [vmem:[%s1038 + $0x151] sm:$0xff]
        %v1100 = vld [vmem:[%s1038 + $0x159] sm:$0xff]
        %v1101 = vld [vmem:[%s1038 + $0x169] sm:$0xff]
        %v1102 = vld [vmem:[%s1038 + $0x171] sm:$0xff]
        %v1103 = vld [vmem:[%s1038 + $0x2] sm:$0xff]
        %v1104 = vld [vmem:[%s1038 + $0xa] sm:$0xff]
        %v1105 = vld [vmem:[%s1038 + $0x1a] sm:$0xff]
        %v1106 = vld [vmem:[%s1038 + $0x22] sm:$0xff]
        %v1107 = vld [vmem:[%s1038 + $0x32] sm:$0xff]
        %v1108 = vld [vmem:[%s1038 + $0x3a] sm:$0xff]
        %v1109 = vld [vmem:[%s1038 + $0x4a] sm:$0xff]
        %v1110 = vld [vmem:[%s1038 + $0x52] sm:$0xff]
        %v1111 = vld [vmem:[%s1038 + $0x62] sm:$0xff]
        %v1112 = vld [vmem:[%s1038 + $0x6a] sm:$0xff]
        %v1113 = vld [vmem:[%s1038 + $0x7a] sm:$0xff]
        %v1114 = vld [vmem:[%s1038 + $0x82] sm:$0xff]
        %v1115 = vld [vmem:[%s1038 + $0x92] sm:$0xff]
        %v1116 = vld [vmem:[%s1038 + $0x9a] sm:$0xff]
        %v1117 = vld [vmem:[%s1038 + $0xaa] sm:$0xff]
        %v1118 = vld [vmem:[%s1038 + $0xb2] sm:$0xff]
        %v1119 = vld [vmem:[%s1038 + $0xc2] sm:$0xff]
        %v1120 = vld [vmem:[%s1038 + $0xca] sm:$0xff]
        %v1121 = vld [vmem:[%s1038 + $0xda] sm:$0xff]
        %v1122 = vld [vmem:[%s1038 + $0xe2] sm:$0xff]
        %v1123 = vld [vmem:[%s1038 + $0xf2] sm:$0xff]
        %v1124 = vld [vmem:[%s1038 + $0xfa] sm:$0xff]
        %v1125 = vld [vmem:[%s1038 + $0x10a] sm:$0xff]
        %v1126 = vld [vmem:[%s1038 + $0x112] sm:$0xff]
        %v1127 = vld [vmem:[%s1038 + $0x122] sm:$0xff]
        %v1128 = vld [vmem:[%s1038 + $0x12a] sm:$0xff]
        %v1129 = vld [vmem:[%s1038 + $0x13a] sm:$0xff]
        %v1130 = vld [vmem:[%s1038 + $0x142] sm:$0xff]
        %v1131 = vld [vmem:[%s1038 + $0x152] sm:$0xff]
        %v1132 = vld [vmem:[%s1038 + $0x15a] sm:$0xff]
        %v1133 = vld [vmem:[%s1038 + $0x16a] sm:$0xff]
        %v1134 = vld [vmem:[%s1038 + $0x172] sm:$0xff]
        %1167 = vrot.lane.b32.xlu0 %v878, 16
        %v1168 = vpop.permute.xlu0 %1167
        %1169 = vrot.lane.b32.xlu0 %v879, 16
        %v1170 = vpop.permute.xlu0 %1169
        %1171 = vrot.lane.b32.xlu0 %v880, 16
        %v1172 = vpop.permute.xlu0 %1171
        %1173 = vrot.lane.b32.xlu0 %v881, 16
        %v1174 = vpop.permute.xlu0 %1173
        %1175 = vrot.lane.b32.xlu0 %v882, 16
        %v1176 = vpop.permute.xlu0 %1175
        %1177 = vrot.lane.b32.xlu0 %v883, 16
        %v1178 = vpop.permute.xlu0 %1177
        %1179 = vrot.lane.b32.xlu0 %v884, 16
        %v1180 = vpop.permute.xlu0 %1179
        %1181 = vrot.lane.b32.xlu0 %v885, 16
        %v1182 = vpop.permute.xlu0 %1181
        %1183 = vrot.lane.b32.xlu0 %v886, 16
        %v1184 = vpop.permute.xlu0 %1183
        %1185 = vrot.lane.b32.xlu0 %v887, 16
        %v1186 = vpop.permute.xlu0 %1185
        %1187 = vrot.lane.b32.xlu0 %v888, 16
        %v1188 = vpop.permute.xlu0 %1187
        %1189 = vrot.lane.b32.xlu0 %v889, 16
        %v1190 = vpop.permute.xlu0 %1189
        %1191 = vrot.lane.b32.xlu0 %v890, 16
        %v1192 = vpop.permute.xlu0 %1191
        %1193 = vrot.lane.b32.xlu0 %v891, 16
        %v1194 = vpop.permute.xlu0 %1193
        %1195 = vrot.lane.b32.xlu0 %v892, 16
        %v1196 = vpop.permute.xlu0 %1195
        %1197 = vrot.lane.b32.xlu0 %v893, 16
        %v1198 = vpop.permute.xlu0 %1197
        %1199 = vrot.lane.b32.xlu0 %v894, 16
        %v1200 = vpop.permute.xlu0 %1199
        %1201 = vrot.lane.b32.xlu0 %v895, 16
        %v1202 = vpop.permute.xlu0 %1201
        %1203 = vrot.lane.b32.xlu0 %v896, 16
        %v1204 = vpop.permute.xlu0 %1203
        %1205 = vrot.lane.b32.xlu0 %v897, 16
        %v1206 = vpop.permute.xlu0 %1205
        %1207 = vrot.lane.b32.xlu0 %v898, 16
        %v1208 = vpop.permute.xlu0 %1207
        %1209 = vrot.lane.b32.xlu0 %v899, 16
        %v1210 = vpop.permute.xlu0 %1209
        %1211 = vrot.lane.b32.xlu0 %v900, 16
        %v1212 = vpop.permute.xlu0 %1211
        %1213 = vrot.lane.b32.xlu0 %v901, 16
        %v1214 = vpop.permute.xlu0 %1213
        %1215 = vrot.lane.b32.xlu0 %v902, 16
        %v1216 = vpop.permute.xlu0 %1215
        %1217 = vrot.lane.b32.xlu0 %v903, 16
        %v1218 = vpop.permute.xlu0 %1217
        %1219 = vrot.lane.b32.xlu0 %v904, 16
        %v1220 = vpop.permute.xlu0 %1219
        %1221 = vrot.lane.b32.xlu0 %v905, 16
        %v1222 = vpop.permute.xlu0 %1221
        %1223 = vrot.lane.b32.xlu0 %v906, 16
        %v1224 = vpop.permute.xlu0 %1223
        %1225 = vrot.lane.b32.xlu0 %v907, 16
        %v1226 = vpop.permute.xlu0 %1225
        %1227 = vrot.lane.b32.xlu0 %v908, 16
        %v1228 = vpop.permute.xlu0 %1227
        %1229 = vrot.lane.b32.xlu0 %v909, 16
        %v1230 = vpop.permute.xlu0 %1229
        %1295 = vrot.lane.b32.xlu0 %v910, 32
        %v1296 = vpop.permute.xlu0 %1295
        %1297 = vrot.lane.b32.xlu0 %v911, 32
        %v1298 = vpop.permute.xlu0 %1297
        %1299 = vrot.lane.b32.xlu0 %v912, 32
        %v1300 = vpop.permute.xlu0 %1299
        %1301 = vrot.lane.b32.xlu0 %v913, 32
        %v1302 = vpop.permute.xlu0 %1301
        %1303 = vrot.lane.b32.xlu0 %v914, 32
        %v1304 = vpop.permute.xlu0 %1303
        %1305 = vrot.lane.b32.xlu0 %v915, 32
        %v1306 = vpop.permute.xlu0 %1305
        %1307 = vrot.lane.b32.xlu0 %v916, 32
        %v1308 = vpop.permute.xlu0 %1307
        %1309 = vrot.lane.b32.xlu0 %v917, 32
        %v1310 = vpop.permute.xlu0 %1309
        %1311 = vrot.lane.b32.xlu0 %v918, 32
        %v1312 = vpop.permute.xlu0 %1311
        %1313 = vrot.lane.b32.xlu0 %v919, 32
        %v1314 = vpop.permute.xlu0 %1313
        %1315 = vrot.lane.b32.xlu0 %v920, 32
        %v1316 = vpop.permute.xlu0 %1315
        %1317 = vrot.lane.b32.xlu0 %v921, 32
        %v1318 = vpop.permute.xlu0 %1317
        %1319 = vrot.lane.b32.xlu0 %v922, 32
        %v1320 = vpop.permute.xlu0 %1319
        %1321 = vrot.lane.b32.xlu0 %v923, 32
        %v1322 = vpop.permute.xlu0 %1321
        %1323 = vrot.lane.b32.xlu0 %v924, 32
        %v1324 = vpop.permute.xlu0 %1323
        %1325 = vrot.lane.b32.xlu0 %v925, 32
        %v1326 = vpop.permute.xlu0 %1325
        %1327 = vrot.lane.b32.xlu0 %v926, 32
        %v1328 = vpop.permute.xlu0 %1327
        %1329 = vrot.lane.b32.xlu0 %v927, 32
        %v1330 = vpop.permute.xlu0 %1329
        %1331 = vrot.lane.b32.xlu0 %v928, 32
        %v1332 = vpop.permute.xlu0 %1331
        %1333 = vrot.lane.b32.xlu0 %v929, 32
        %v1334 = vpop.permute.xlu0 %1333
        %1335 = vrot.lane.b32.xlu0 %v930, 32
        %v1336 = vpop.permute.xlu0 %1335
        %1337 = vrot.lane.b32.xlu0 %v931, 32
        %v1338 = vpop.permute.xlu0 %1337
        %1339 = vrot.lane.b32.xlu0 %v932, 32
        %v1340 = vpop.permute.xlu0 %1339
        %1341 = vrot.lane.b32.xlu0 %v933, 32
        %v1342 = vpop.permute.xlu0 %1341
        %1343 = vrot.lane.b32.xlu0 %v934, 32
        %v1344 = vpop.permute.xlu0 %1343
        %1345 = vrot.lane.b32.xlu0 %v935, 32
        %v1346 = vpop.permute.xlu0 %1345
        %1347 = vrot.lane.b32.xlu0 %v936, 32
        %v1348 = vpop.permute.xlu0 %1347
        %1349 = vrot.lane.b32.xlu0 %v937, 32
        %v1350 = vpop.permute.xlu0 %1349
        %1351 = vrot.lane.b32.xlu0 %v938, 32
        %v1352 = vpop.permute.xlu0 %1351
        %1353 = vrot.lane.b32.xlu0 %v939, 32
        %v1354 = vpop.permute.xlu0 %1353
        %1355 = vrot.lane.b32.xlu0 %v940, 32
        %v1356 = vpop.permute.xlu0 %1355
        %1357 = vrot.lane.b32.xlu0 %v941, 32
        %v1358 = vpop.permute.xlu0 %1357
        %1423 = vrot.lane.b32.xlu0 %v942, 48
        %v1424 = vpop.permute.xlu0 %1423
        %1425 = vrot.lane.b32.xlu0 %v943, 48
        %v1426 = vpop.permute.xlu0 %1425
        %1427 = vrot.lane.b32.xlu0 %v944, 48
        %v1428 = vpop.permute.xlu0 %1427
        %1429 = vrot.lane.b32.xlu0 %v945, 48
        %v1430 = vpop.permute.xlu0 %1429
        %1431 = vrot.lane.b32.xlu0 %v946, 48
        %v1432 = vpop.permute.xlu0 %1431
        %1433 = vrot.lane.b32.xlu0 %v947, 48
        %v1434 = vpop.permute.xlu0 %1433
        %1435 = vrot.lane.b32.xlu0 %v948, 48
        %v1436 = vpop.permute.xlu0 %1435
        %1437 = vrot.lane.b32.xlu0 %v949, 48
        %v1438 = vpop.permute.xlu0 %1437
        %1439 = vrot.lane.b32.xlu0 %v950, 48
        %v1440 = vpop.permute.xlu0 %1439
        %1441 = vrot.lane.b32.xlu0 %v951, 48
        %v1442 = vpop.permute.xlu0 %1441
        %1443 = vrot.lane.b32.xlu0 %v952, 48
        %v1444 = vpop.permute.xlu0 %1443
        %1445 = vrot.lane.b32.xlu0 %v953, 48
        %v1446 = vpop.permute.xlu0 %1445
        %1447 = vrot.lane.b32.xlu0 %v954, 48
        %v1448 = vpop.permute.xlu0 %1447
        %1449 = vrot.lane.b32.xlu0 %v955, 48
        %v1450 = vpop.permute.xlu0 %1449
        %1451 = vrot.lane.b32.xlu0 %v956, 48
        %v1452 = vpop.permute.xlu0 %1451
        %1453 = vrot.lane.b32.xlu0 %v957, 48
        %v1454 = vpop.permute.xlu0 %1453
        %1455 = vrot.lane.b32.xlu0 %v958, 48
        %v1456 = vpop.permute.xlu0 %1455
        %1457 = vrot.lane.b32.xlu0 %v959, 48
        %v1458 = vpop.permute.xlu0 %1457
        %1459 = vrot.lane.b32.xlu0 %v960, 48
        %v1460 = vpop.permute.xlu0 %1459
        %1461 = vrot.lane.b32.xlu0 %v961, 48
        %v1462 = vpop.permute.xlu0 %1461
        %1463 = vrot.lane.b32.xlu0 %v962, 48
        %v1464 = vpop.permute.xlu0 %1463
        %1465 = vrot.lane.b32.xlu0 %v963, 48
        %v1466 = vpop.permute.xlu0 %1465
        %1467 = vrot.lane.b32.xlu0 %v964, 48
        %v1468 = vpop.permute.xlu0 %1467
        %1469 = vrot.lane.b32.xlu0 %v965, 48
        %v1470 = vpop.permute.xlu0 %1469
        %1471 = vrot.lane.b32.xlu0 %v966, 48
        %v1472 = vpop.permute.xlu0 %1471
        %1473 = vrot.lane.b32.xlu0 %v967, 48
        %v1474 = vpop.permute.xlu0 %1473
        %1475 = vrot.lane.b32.xlu0 %v968, 48
        %v1476 = vpop.permute.xlu0 %1475
        %1477 = vrot.lane.b32.xlu0 %v969, 48
        %v1478 = vpop.permute.xlu0 %1477
        %1479 = vrot.lane.b32.xlu0 %v970, 48
        %v1480 = vpop.permute.xlu0 %1479
        %1481 = vrot.lane.b32.xlu0 %v971, 48
        %v1482 = vpop.permute.xlu0 %1481
        %1483 = vrot.lane.b32.xlu0 %v972, 48
        %v1484 = vpop.permute.xlu0 %1483
        %1485 = vrot.lane.b32.xlu0 %v973, 48
        %v1486 = vpop.permute.xlu0 %1485
        %1551 = vrot.lane.b32.xlu0 %v974, 64
        %v1552 = vpop.permute.xlu0 %1551
        %1553 = vrot.lane.b32.xlu0 %v975, 64
        %v1554 = vpop.permute.xlu0 %1553
        %1555 = vrot.lane.b32.xlu0 %v976, 64
        %v1556 = vpop.permute.xlu0 %1555
        %1557 = vrot.lane.b32.xlu0 %v977, 64
        %v1558 = vpop.permute.xlu0 %1557
        %1559 = vrot.lane.b32.xlu0 %v978, 64
        %v1560 = vpop.permute.xlu0 %1559
        %1561 = vrot.lane.b32.xlu0 %v979, 64
        %v1562 = vpop.permute.xlu0 %1561
        %1563 = vrot.lane.b32.xlu0 %v980, 64
        %v1564 = vpop.permute.xlu0 %1563
        %1565 = vrot.lane.b32.xlu0 %v981, 64
        %v1566 = vpop.permute.xlu0 %1565
        %1567 = vrot.lane.b32.xlu0 %v982, 64
        %v1568 = vpop.permute.xlu0 %1567
        %1569 = vrot.lane.b32.xlu0 %v983, 64
        %v1570 = vpop.permute.xlu0 %1569
        %1571 = vrot.lane.b32.xlu0 %v984, 64
        %v1572 = vpop.permute.xlu0 %1571
        %1573 = vrot.lane.b32.xlu0 %v985, 64
        %v1574 = vpop.permute.xlu0 %1573
        %1575 = vrot.lane.b32.xlu0 %v986, 64
        %v1576 = vpop.permute.xlu0 %1575
        %1577 = vrot.lane.b32.xlu0 %v987, 64
        %v1578 = vpop.permute.xlu0 %1577
        %1579 = vrot.lane.b32.xlu0 %v988, 64
        %v1580 = vpop.permute.xlu0 %1579
        %1581 = vrot.lane.b32.xlu0 %v989, 64
        %v1582 = vpop.permute.xlu0 %1581
        %1583 = vrot.lane.b32.xlu0 %v990, 64
        %v1584 = vpop.permute.xlu0 %1583
        %1585 = vrot.lane.b32.xlu0 %v991, 64
        %v1586 = vpop.permute.xlu0 %1585
        %1587 = vrot.lane.b32.xlu0 %v992, 64
        %v1588 = vpop.permute.xlu0 %1587
        %1589 = vrot.lane.b32.xlu0 %v993, 64
        %v1590 = vpop.permute.xlu0 %1589
        %1591 = vrot.lane.b32.xlu0 %v994, 64
        %v1592 = vpop.permute.xlu0 %1591
        %1593 = vrot.lane.b32.xlu0 %v995, 64
        %v1594 = vpop.permute.xlu0 %1593
        %1595 = vrot.lane.b32.xlu0 %v996, 64
        %v1596 = vpop.permute.xlu0 %1595
        %1597 = vrot.lane.b32.xlu0 %v997, 64
        %v1598 = vpop.permute.xlu0 %1597
        %1599 = vrot.lane.b32.xlu0 %v998, 64
        %v1600 = vpop.permute.xlu0 %1599
        %1601 = vrot.lane.b32.xlu0 %v999, 64
        %v1602 = vpop.permute.xlu0 %1601
        %1603 = vrot.lane.b32.xlu0 %v1000, 64
        %v1604 = vpop.permute.xlu0 %1603
        %1605 = vrot.lane.b32.xlu0 %v1001, 64
        %v1606 = vpop.permute.xlu0 %1605
        %1607 = vrot.lane.b32.xlu0 %v1002, 64
        %v1608 = vpop.permute.xlu0 %1607
        %1609 = vrot.lane.b32.xlu0 %v1003, 64
        %v1610 = vpop.permute.xlu0 %1609
        %1611 = vrot.lane.b32.xlu0 %v1004, 64
        %v1612 = vpop.permute.xlu0 %1611
        %1613 = vrot.lane.b32.xlu0 %v1005, 64
        %v1614 = vpop.permute.xlu0 %1613
        %1679 = vrot.lane.b32.xlu0 %v1006, 80
        %v1680 = vpop.permute.xlu0 %1679
        %1681 = vrot.lane.b32.xlu0 %v1007, 80
        %v1682 = vpop.permute.xlu0 %1681
        %1683 = vrot.lane.b32.xlu0 %v1008, 80
        %v1684 = vpop.permute.xlu0 %1683
        %1685 = vrot.lane.b32.xlu0 %v1009, 80
        %v1686 = vpop.permute.xlu0 %1685
        %1687 = vrot.lane.b32.xlu0 %v1010, 80
        %v1688 = vpop.permute.xlu0 %1687
        %1689 = vrot.lane.b32.xlu0 %v1011, 80
        %v1690 = vpop.permute.xlu0 %1689
        %1691 = vrot.lane.b32.xlu0 %v1012, 80
        %v1692 = vpop.permute.xlu0 %1691
        %1693 = vrot.lane.b32.xlu0 %v1013, 80
        %v1694 = vpop.permute.xlu0 %1693
        %1695 = vrot.lane.b32.xlu0 %v1014, 80
        %v1696 = vpop.permute.xlu0 %1695
        %1697 = vrot.lane.b32.xlu0 %v1015, 80
        %v1698 = vpop.permute.xlu0 %1697
        %1699 = vrot.lane.b32.xlu0 %v1016, 80
        %v1700 = vpop.permute.xlu0 %1699
        %1701 = vrot.lane.b32.xlu0 %v1017, 80
        %v1702 = vpop.permute.xlu0 %1701
        %1703 = vrot.lane.b32.xlu0 %v1018, 80
        %v1704 = vpop.permute.xlu0 %1703
        %1705 = vrot.lane.b32.xlu0 %v1019, 80
        %v1706 = vpop.permute.xlu0 %1705
        %1707 = vrot.lane.b32.xlu0 %v1020, 80
        %v1708 = vpop.permute.xlu0 %1707
        %1709 = vrot.lane.b32.xlu0 %v1021, 80
        %v1710 = vpop.permute.xlu0 %1709
        %1711 = vrot.lane.b32.xlu0 %v1022, 80
        %v1712 = vpop.permute.xlu0 %1711
        %1713 = vrot.lane.b32.xlu0 %v1023, 80
        %v1714 = vpop.permute.xlu0 %1713
        %1715 = vrot.lane.b32.xlu0 %v1024, 80
        %v1716 = vpop.permute.xlu0 %1715
        %1717 = vrot.lane.b32.xlu0 %v1025, 80
        %v1718 = vpop.permute.xlu0 %1717
        %1719 = vrot.lane.b32.xlu0 %v1026, 80
        %v1720 = vpop.permute.xlu0 %1719
        %1721 = vrot.lane.b32.xlu0 %v1027, 80
        %v1722 = vpop.permute.xlu0 %1721
        %1723 = vrot.lane.b32.xlu0 %v1028, 80
        %v1724 = vpop.permute.xlu0 %1723
        %1725 = vrot.lane.b32.xlu0 %v1029, 80
        %v1726 = vpop.permute.xlu0 %1725
        %1727 = vrot.lane.b32.xlu0 %v1030, 80
        %v1728 = vpop.permute.xlu0 %1727
        %1729 = vrot.lane.b32.xlu0 %v1031, 80
        %v1730 = vpop.permute.xlu0 %1729
        %1731 = vrot.lane.b32.xlu0 %v1032, 80
        %v1732 = vpop.permute.xlu0 %1731
        %1733 = vrot.lane.b32.xlu0 %v1033, 80
        %v1734 = vpop.permute.xlu0 %1733
        %1735 = vrot.lane.b32.xlu0 %v1034, 80
        %v1736 = vpop.permute.xlu0 %1735
        %1737 = vrot.lane.b32.xlu0 %v1035, 80
        %v1738 = vpop.permute.xlu0 %1737
        %1739 = vrot.lane.b32.xlu0 %v1036, 80
        %v1740 = vpop.permute.xlu0 %1739
        %1741 = vrot.lane.b32.xlu0 %v1037, 80
        %v1742 = vpop.permute.xlu0 %1741
        %1807 = vrot.lane.b32.xlu0 %v1039, 96
        %v1808 = vpop.permute.xlu0 %1807
        %1809 = vrot.lane.b32.xlu0 %v1040, 96
        %v1810 = vpop.permute.xlu0 %1809
        %1811 = vrot.lane.b32.xlu0 %v1041, 96
        %v1812 = vpop.permute.xlu0 %1811
        %1813 = vrot.lane.b32.xlu0 %v1042, 96
        %v1814 = vpop.permute.xlu0 %1813
        %1815 = vrot.lane.b32.xlu0 %v1043, 96
        %v1816 = vpop.permute.xlu0 %1815
        %1817 = vrot.lane.b32.xlu0 %v1044, 96
        %v1818 = vpop.permute.xlu0 %1817
        %1819 = vrot.lane.b32.xlu0 %v1045, 96
        %v1820 = vpop.permute.xlu0 %1819
        %1821 = vrot.lane.b32.xlu0 %v1046, 96
        %v1822 = vpop.permute.xlu0 %1821
        %1823 = vrot.lane.b32.xlu0 %v1047, 96
        %v1824 = vpop.permute.xlu0 %1823
        %1825 = vrot.lane.b32.xlu0 %v1048, 96
        %v1826 = vpop.permute.xlu0 %1825
        %1827 = vrot.lane.b32.xlu0 %v1049, 96
        %v1828 = vpop.permute.xlu0 %1827
        %1829 = vrot.lane.b32.xlu0 %v1050, 96
        %v1830 = vpop.permute.xlu0 %1829
        %1831 = vrot.lane.b32.xlu0 %v1051, 96
        %v1832 = vpop.permute.xlu0 %1831
        %1833 = vrot.lane.b32.xlu0 %v1052, 96
        %v1834 = vpop.permute.xlu0 %1833
        %1835 = vrot.lane.b32.xlu0 %v1053, 96
        %v1836 = vpop.permute.xlu0 %1835
        %1837 = vrot.lane.b32.xlu0 %v1054, 96
        %v1838 = vpop.permute.xlu0 %1837
        %1839 = vrot.lane.b32.xlu0 %v1055, 96
        %v1840 = vpop.permute.xlu0 %1839
        %1841 = vrot.lane.b32.xlu0 %v1056, 96
        %v1842 = vpop.permute.xlu0 %1841
        %1843 = vrot.lane.b32.xlu0 %v1057, 96
        %v1844 = vpop.permute.xlu0 %1843
        %1845 = vrot.lane.b32.xlu0 %v1058, 96
        %v1846 = vpop.permute.xlu0 %1845
        %1847 = vrot.lane.b32.xlu0 %v1059, 96
        %v1848 = vpop.permute.xlu0 %1847
        %1849 = vrot.lane.b32.xlu0 %v1060, 96
        %v1850 = vpop.permute.xlu0 %1849
        %1851 = vrot.lane.b32.xlu0 %v1061, 96
        %v1852 = vpop.permute.xlu0 %1851
        %1853 = vrot.lane.b32.xlu0 %v1062, 96
        %v1854 = vpop.permute.xlu0 %1853
        %1855 = vrot.lane.b32.xlu0 %v1063, 96
        %v1856 = vpop.permute.xlu0 %1855
        %1857 = vrot.lane.b32.xlu0 %v1064, 96
        %v1858 = vpop.permute.xlu0 %1857
        %1859 = vrot.lane.b32.xlu0 %v1065, 96
        %v1860 = vpop.permute.xlu0 %1859
        %1861 = vrot.lane.b32.xlu0 %v1066, 96
        %v1862 = vpop.permute.xlu0 %1861
        %1863 = vrot.lane.b32.xlu0 %v1067, 96
        %v1864 = vpop.permute.xlu0 %1863
        %1865 = vrot.lane.b32.xlu0 %v1068, 96
        %v1866 = vpop.permute.xlu0 %1865
        %1867 = vrot.lane.b32.xlu0 %v1069, 96
        %v1868 = vpop.permute.xlu0 %1867
        %1869 = vrot.lane.b32.xlu0 %v1070, 96
        %v1870 = vpop.permute.xlu0 %1869
        %1935 = vrot.lane.b32.xlu0 %v1071, 112
        %v1936 = vpop.permute.xlu0 %1935
        %1937 = vrot.lane.b32.xlu0 %v1072, 112
        %v1938 = vpop.permute.xlu0 %1937
        %1939 = vrot.lane.b32.xlu0 %v1073, 112
        %v1940 = vpop.permute.xlu0 %1939
        %1941 = vrot.lane.b32.xlu0 %v1074, 112
        %v1942 = vpop.permute.xlu0 %1941
        %1943 = vrot.lane.b32.xlu0 %v1075, 112
        %v1944 = vpop.permute.xlu0 %1943
        %1945 = vrot.lane.b32.xlu0 %v1076, 112
        %v1946 = vpop.permute.xlu0 %1945
        %1947 = vrot.lane.b32.xlu0 %v1077, 112
        %v1948 = vpop.permute.xlu0 %1947
        %1949 = vrot.lane.b32.xlu0 %v1078, 112
        %v1950 = vpop.permute.xlu0 %1949
        %1951 = vrot.lane.b32.xlu0 %v1079, 112
        %v1952 = vpop.permute.xlu0 %1951
        %1953 = vrot.lane.b32.xlu0 %v1080, 112
        %v1954 = vpop.permute.xlu0 %1953
        %1955 = vrot.lane.b32.xlu0 %v1081, 112
        %v1956 = vpop.permute.xlu0 %1955
        %1957 = vrot.lane.b32.xlu0 %v1082, 112
        %v1958 = vpop.permute.xlu0 %1957
        %1959 = vrot.lane.b32.xlu0 %v1083, 112
        %v1960 = vpop.permute.xlu0 %1959
        %1961 = vrot.lane.b32.xlu0 %v1084, 112
        %v1962 = vpop.permute.xlu0 %1961
        %1963 = vrot.lane.b32.xlu0 %v1085, 112
        %v1964 = vpop.permute.xlu0 %1963
        %1965 = vrot.lane.b32.xlu0 %v1086, 112
        %v1966 = vpop.permute.xlu0 %1965
        %1967 = vrot.lane.b32.xlu0 %v1087, 112
        %v1968 = vpop.permute.xlu0 %1967
        %1969 = vrot.lane.b32.xlu0 %v1088, 112
        %v1970 = vpop.permute.xlu0 %1969
        %1971 = vrot.lane.b32.xlu0 %v1089, 112
        %v1972 = vpop.permute.xlu0 %1971
        %1973 = vrot.lane.b32.xlu0 %v1090, 112
        %v1974 = vpop.permute.xlu0 %1973
        %1975 = vrot.lane.b32.xlu0 %v1091, 112
        %v1976 = vpop.permute.xlu0 %1975
        %1977 = vrot.lane.b32.xlu0 %v1092, 112
        %v1978 = vpop.permute.xlu0 %1977
        %1979 = vrot.lane.b32.xlu0 %v1093, 112
        %v1980 = vpop.permute.xlu0 %1979
        %1981 = vrot.lane.b32.xlu0 %v1094, 112
        %v1982 = vpop.permute.xlu0 %1981
        %1983 = vrot.lane.b32.xlu0 %v1095, 112
        %v1984 = vpop.permute.xlu0 %1983
        %1985 = vrot.lane.b32.xlu0 %v1096, 112
        %v1986 = vpop.permute.xlu0 %1985
        %1987 = vrot.lane.b32.xlu0 %v1097, 112
        %v1988 = vpop.permute.xlu0 %1987
        %1989 = vrot.lane.b32.xlu0 %v1098, 112
        %v1990 = vpop.permute.xlu0 %1989
        %1991 = vrot.lane.b32.xlu0 %v1099, 112
        %v1992 = vpop.permute.xlu0 %1991
        %1993 = vrot.lane.b32.xlu0 %v1100, 112
        %v1994 = vpop.permute.xlu0 %1993
        %1995 = vrot.lane.b32.xlu0 %v1101, 112
        %v1996 = vpop.permute.xlu0 %1995
        %1997 = vrot.lane.b32.xlu0 %v1102, 112
        %v1998 = vpop.permute.xlu0 %1997
        %v2031 = vsel %vm627, %v846, %v1168
        %v2032 = vsel %vm627, %v847, %v1170
        %v2033 = vsel %vm627, %v848, %v1172
        %v2034 = vsel %vm627, %v849, %v1174
        %v2035 = vsel %vm627, %v850, %v1176
        %v2036 = vsel %vm627, %v851, %v1178
        %v2037 = vsel %vm627, %v852, %v1180
        %v2038 = vsel %vm627, %v853, %v1182
        %v2039 = vsel %vm627, %v854, %v1184
        %v2040 = vsel %vm627, %v855, %v1186
        %v2041 = vsel %vm627, %v856, %v1188
        %v2042 = vsel %vm627, %v857, %v1190
        %v2043 = vsel %vm627, %v858, %v1192
        %v2044 = vsel %vm627, %v859, %v1194
        %v2045 = vsel %vm627, %v860, %v1196
        %v2046 = vsel %vm627, %v861, %v1198
        %v2047 = vsel %vm627, %v862, %v1200
        %v2048 = vsel %vm627, %v863, %v1202
        %v2049 = vsel %vm627, %v864, %v1204
        %v2050 = vsel %vm627, %v865, %v1206
        %v2051 = vsel %vm627, %v866, %v1208
        %v2052 = vsel %vm627, %v867, %v1210
        %v2053 = vsel %vm627, %v868, %v1212
        %v2054 = vsel %vm627, %v869, %v1214
        %v2055 = vsel %vm627, %v870, %v1216
        %v2056 = vsel %vm627, %v871, %v1218
        %v2057 = vsel %vm627, %v872, %v1220
        %v2058 = vsel %vm627, %v873, %v1222
        %v2059 = vsel %vm627, %v874, %v1224
        %v2060 = vsel %vm627, %v875, %v1226
        %v2061 = vsel %vm627, %v876, %v1228
        %v2062 = vsel %vm627, %v877, %v1230
        %vm2063 = vcmask 261120
        %v2064 = vsel %vm2063, %v2031, %v1296
        %v2065 = vsel %vm2063, %v2032, %v1298
        %v2066 = vsel %vm2063, %v2033, %v1300
        %v2067 = vsel %vm2063, %v2034, %v1302
        %v2068 = vsel %vm2063, %v2035, %v1304
        %v2069 = vsel %vm2063, %v2036, %v1306
        %v2070 = vsel %vm2063, %v2037, %v1308
        %v2071 = vsel %vm2063, %v2038, %v1310
        %v2072 = vsel %vm2063, %v2039, %v1312
        %v2073 = vsel %vm2063, %v2040, %v1314
        %v2074 = vsel %vm2063, %v2041, %v1316
        %v2075 = vsel %vm2063, %v2042, %v1318
        %v2076 = vsel %vm2063, %v2043, %v1320
        %v2077 = vsel %vm2063, %v2044, %v1322
        %v2078 = vsel %vm2063, %v2045, %v1324
        %v2079 = vsel %vm2063, %v2046, %v1326
        %v2080 = vsel %vm2063, %v2047, %v1328
        %v2081 = vsel %vm2063, %v2048, %v1330
        %v2082 = vsel %vm2063, %v2049, %v1332
        %v2083 = vsel %vm2063, %v2050, %v1334
        %v2084 = vsel %vm2063, %v2051, %v1336
        %v2085 = vsel %vm2063, %v2052, %v1338
        %v2086 = vsel %vm2063, %v2053, %v1340
        %v2087 = vsel %vm2063, %v2054, %v1342
        %v2088 = vsel %vm2063, %v2055, %v1344
        %v2089 = vsel %vm2063, %v2056, %v1346
        %v2090 = vsel %vm2063, %v2057, %v1348
        %v2091 = vsel %vm2063, %v2058, %v1350
        %v2092 = vsel %vm2063, %v2059, %v1352
        %v2093 = vsel %vm2063, %v2060, %v1354
        %v2094 = vsel %vm2063, %v2061, %v1356
        %v2095 = vsel %vm2063, %v2062, %v1358
        %vm2096 = vcmask 392192
        %v2097 = vsel %vm2096, %v2064, %v1424
        %v2098 = vsel %vm2096, %v2065, %v1426
        %v2099 = vsel %vm2096, %v2066, %v1428
        %v2100 = vsel %vm2096, %v2067, %v1430
        %v2101 = vsel %vm2096, %v2068, %v1432
        %v2102 = vsel %vm2096, %v2069, %v1434
        %v2103 = vsel %vm2096, %v2070, %v1436
        %v2104 = vsel %vm2096, %v2071, %v1438
        %v2105 = vsel %vm2096, %v2072, %v1440
        %v2106 = vsel %vm2096, %v2073, %v1442
        %v2107 = vsel %vm2096, %v2074, %v1444
        %v2108 = vsel %vm2096, %v2075, %v1446
        %v2109 = vsel %vm2096, %v2076, %v1448
        %v2110 = vsel %vm2096, %v2077, %v1450
        %v2111 = vsel %vm2096, %v2078, %v1452
        %v2112 = vsel %vm2096, %v2079, %v1454
        %v2113 = vsel %vm2096, %v2080, %v1456
        %v2114 = vsel %vm2096, %v2081, %v1458
        %v2115 = vsel %vm2096, %v2082, %v1460
        %v2116 = vsel %vm2096, %v2083, %v1462
        %v2117 = vsel %vm2096, %v2084, %v1464
        %v2118 = vsel %vm2096, %v2085, %v1466
        %v2119 = vsel %vm2096, %v2086, %v1468
        %v2120 = vsel %vm2096, %v2087, %v1470
        %v2121 = vsel %vm2096, %v2088, %v1472
        %v2122 = vsel %vm2096, %v2089, %v1474
        %v2123 = vsel %vm2096, %v2090, %v1476
        %v2124 = vsel %vm2096, %v2091, %v1478
        %v2125 = vsel %vm2096, %v2092, %v1480
        %v2126 = vsel %vm2096, %v2093, %v1482
        %v2127 = vsel %vm2096, %v2094, %v1484
        %v2128 = vsel %vm2096, %v2095, %v1486
        %v2129 = vsel %vm385, %v2097, %v1552
        %v2130 = vsel %vm385, %v2098, %v1554
        %v2131 = vsel %vm385, %v2099, %v1556
        %v2132 = vsel %vm385, %v2100, %v1558
        %v2133 = vsel %vm385, %v2101, %v1560
        %v2134 = vsel %vm385, %v2102, %v1562
        %v2135 = vsel %vm385, %v2103, %v1564
        %v2136 = vsel %vm385, %v2104, %v1566
        %v2137 = vsel %vm385, %v2105, %v1568
        %v2138 = vsel %vm385, %v2106, %v1570
        %v2139 = vsel %vm385, %v2107, %v1572
        %v2140 = vsel %vm385, %v2108, %v1574
        %v2141 = vsel %vm385, %v2109, %v1576
        %v2142 = vsel %vm385, %v2110, %v1578
        %v2143 = vsel %vm385, %v2111, %v1580
        %v2144 = vsel %vm385, %v2112, %v1582
        %v2145 = vsel %vm385, %v2113, %v1584
        %v2146 = vsel %vm385, %v2114, %v1586
        %v2147 = vsel %vm385, %v2115, %v1588
        %v2148 = vsel %vm385, %v2116, %v1590
        %v2149 = vsel %vm385, %v2117, %v1592
        %v2150 = vsel %vm385, %v2118, %v1594
        %v2151 = vsel %vm385, %v2119, %v1596
        %v2152 = vsel %vm385, %v2120, %v1598
        %v2153 = vsel %vm385, %v2121, %v1600
        %v2154 = vsel %vm385, %v2122, %v1602
        %v2155 = vsel %vm385, %v2123, %v1604
        %v2156 = vsel %vm385, %v2124, %v1606
        %v2157 = vsel %vm385, %v2125, %v1608
        %v2158 = vsel %vm385, %v2126, %v1610
        %v2159 = vsel %vm385, %v2127, %v1612
        %v2160 = vsel %vm385, %v2128, %v1614
        %vm2161 = vcmask 654336
        %v2162 = vsel %vm2161, %v2129, %v1680
        %v2163 = vsel %vm2161, %v2130, %v1682
        %v2164 = vsel %vm2161, %v2131, %v1684
        %v2165 = vsel %vm2161, %v2132, %v1686
        %v2166 = vsel %vm2161, %v2133, %v1688
        %v2167 = vsel %vm2161, %v2134, %v1690
        %v2168 = vsel %vm2161, %v2135, %v1692
        %v2169 = vsel %vm2161, %v2136, %v1694
        %v2170 = vsel %vm2161, %v2137, %v1696
        %v2171 = vsel %vm2161, %v2138, %v1698
        %v2172 = vsel %vm2161, %v2139, %v1700
        %v2173 = vsel %vm2161, %v2140, %v1702
        %v2174 = vsel %vm2161, %v2141, %v1704
        %v2175 = vsel %vm2161, %v2142, %v1706
        %v2176 = vsel %vm2161, %v2143, %v1708
        %v2177 = vsel %vm2161, %v2144, %v1710
        %v2178 = vsel %vm2161, %v2145, %v1712
        %v2179 = vsel %vm2161, %v2146, %v1714
        %v2180 = vsel %vm2161, %v2147, %v1716
        %v2181 = vsel %vm2161, %v2148, %v1718
        %v2182 = vsel %vm2161, %v2149, %v1720
        %v2183 = vsel %vm2161, %v2150, %v1722
        %v2184 = vsel %vm2161, %v2151, %v1724
        %v2185 = vsel %vm2161, %v2152, %v1726
        %v2186 = vsel %vm2161, %v2153, %v1728
        %v2187 = vsel %vm2161, %v2154, %v1730
        %v2188 = vsel %vm2161, %v2155, %v1732
        %v2189 = vsel %vm2161, %v2156, %v1734
        %v2190 = vsel %vm2161, %v2157, %v1736
        %v2191 = vsel %vm2161, %v2158, %v1738
        %v2192 = vsel %vm2161, %v2159, %v1740
        %v2193 = vsel %vm2161, %v2160, %v1742
        %vm2194 = vcmask 785408
        %v2195 = vsel %vm2194, %v2162, %v1808
        %v2196 = vsel %vm2194, %v2163, %v1810
        %v2197 = vsel %vm2194, %v2164, %v1812
        %v2198 = vsel %vm2194, %v2165, %v1814
        %v2199 = vsel %vm2194, %v2166, %v1816
        %v2200 = vsel %vm2194, %v2167, %v1818
        %v2201 = vsel %vm2194, %v2168, %v1820
        %v2202 = vsel %vm2194, %v2169, %v1822
        %v2203 = vsel %vm2194, %v2170, %v1824
        %v2204 = vsel %vm2194, %v2171, %v1826
        %v2205 = vsel %vm2194, %v2172, %v1828
        %v2206 = vsel %vm2194, %v2173, %v1830
        %v2207 = vsel %vm2194, %v2174, %v1832
        %v2208 = vsel %vm2194, %v2175, %v1834
        %v2209 = vsel %vm2194, %v2176, %v1836
        %v2210 = vsel %vm2194, %v2177, %v1838
        %v2211 = vsel %vm2194, %v2178, %v1840
        %v2212 = vsel %vm2194, %v2179, %v1842
        %v2213 = vsel %vm2194, %v2180, %v1844
        %v2214 = vsel %vm2194, %v2181, %v1846
        %v2215 = vsel %vm2194, %v2182, %v1848
        %v2216 = vsel %vm2194, %v2183, %v1850
        %v2217 = vsel %vm2194, %v2184, %v1852
        %v2218 = vsel %vm2194, %v2185, %v1854
        %v2219 = vsel %vm2194, %v2186, %v1856
        %v2220 = vsel %vm2194, %v2187, %v1858
        %v2221 = vsel %vm2194, %v2188, %v1860
        %v2222 = vsel %vm2194, %v2189, %v1862
        %v2223 = vsel %vm2194, %v2190, %v1864
        %v2224 = vsel %vm2194, %v2191, %v1866
        %v2225 = vsel %vm2194, %v2192, %v1868
        %v2226 = vsel %vm2194, %v2193, %v1870
        %vm2227 = vcmask 916480
        %v2228 = vsel %vm2227, %v2195, %v1936
        %v2229 = vsel %vm2227, %v2196, %v1938
        %v2230 = vsel %vm2227, %v2197, %v1940
        %v2231 = vsel %vm2227, %v2198, %v1942
        %v2232 = vsel %vm2227, %v2199, %v1944
        %v2233 = vsel %vm2227, %v2200, %v1946
        %v2234 = vsel %vm2227, %v2201, %v1948
        %v2235 = vsel %vm2227, %v2202, %v1950
        %v2236 = vsel %vm2227, %v2203, %v1952
        %v2237 = vsel %vm2227, %v2204, %v1954
        %v2238 = vsel %vm2227, %v2205, %v1956
        %v2239 = vsel %vm2227, %v2206, %v1958
        %v2240 = vsel %vm2227, %v2207, %v1960
        %v2241 = vsel %vm2227, %v2208, %v1962
        %v2242 = vsel %vm2227, %v2209, %v1964
        %v2243 = vsel %vm2227, %v2210, %v1966
        %v2244 = vsel %vm2227, %v2211, %v1968
        %v2245 = vsel %vm2227, %v2212, %v1970
        %v2246 = vsel %vm2227, %v2213, %v1972
        %v2247 = vsel %vm2227, %v2214, %v1974
        %v2248 = vsel %vm2227, %v2215, %v1976
        %v2249 = vsel %vm2227, %v2216, %v1978
        %v2250 = vsel %vm2227, %v2217, %v1980
        %v2251 = vsel %vm2227, %v2218, %v1982
        %v2252 = vsel %vm2227, %v2219, %v1984
        %v2253 = vsel %vm2227, %v2220, %v1986
        %v2254 = vsel %vm2227, %v2221, %v1988
        %v2255 = vsel %vm2227, %v2222, %v1990
        %v2256 = vsel %vm2227, %v2223, %v1992
        %v2257 = vsel %vm2227, %v2224, %v1994
        %v2258 = vsel %vm2227, %v2225, %v1996
        %v2259 = vsel %vm2227, %v2226, %v1998
        %v2260 = vpack.c.bf16 %v2229, %v2228
        %v2261 = vpack.c.bf16 %v1104, %v1103
        %v2262 = vpack.c.bf16 %v2231, %v2230
        %v2263 = vpack.c.bf16 %v1106, %v1105
        %v2264 = vpack.c.bf16 %v2233, %v2232
        %v2265 = vpack.c.bf16 %v1108, %v1107
        %v2266 = vpack.c.bf16 %v2235, %v2234
        %v2267 = vpack.c.bf16 %v1110, %v1109
        %v2268 = vpack.c.bf16 %v2237, %v2236
        %v2269 = vpack.c.bf16 %v1112, %v1111
        %v2270 = vpack.c.bf16 %v2239, %v2238
        %v2271 = vpack.c.bf16 %v1114, %v1113
        %v2272 = vpack.c.bf16 %v2241, %v2240
        %v2273 = vpack.c.bf16 %v1116, %v1115
        %v2274 = vpack.c.bf16 %v2243, %v2242
        %v2275 = vpack.c.bf16 %v1118, %v1117
        %v2276 = vpack.c.bf16 %v2245, %v2244
        %v2277 = vpack.c.bf16 %v1120, %v1119
        %v2278 = vpack.c.bf16 %v2247, %v2246
        %v2279 = vpack.c.bf16 %v1122, %v1121
        %v2280 = vpack.c.bf16 %v2249, %v2248
        %v2281 = vpack.c.bf16 %v1124, %v1123
        %v2282 = vpack.c.bf16 %v2251, %v2250
        %v2283 = vpack.c.bf16 %v1126, %v1125
        %v2284 = vpack.c.bf16 %v2253, %v2252
        %v2285 = vpack.c.bf16 %v1128, %v1127
        %v2286 = vpack.c.bf16 %v2255, %v2254
        %v2287 = vpack.c.bf16 %v1130, %v1129
        %v2288 = vpack.c.bf16 %v2257, %v2256
        %v2289 = vpack.c.bf16 %v1132, %v1131
        %v2290 = vpack.c.bf16 %v2259, %v2258
        %v2291 = vpack.c.bf16 %v1134, %v1133
        %v2292 = vld [vmem:[%s3] sm:$0xf]
        %v2293 = vld [vmem:[%s3 + $0x4] sm:$0xf]
        %v2294 = vld [vmem:[%s3 + $0x8] sm:$0xf]
        %v2295 = vld [vmem:[%s3 + $0xc] sm:$0xf]
        %v2296 = vld [vmem:[%s3 + $0x10] sm:$0xf]
        %v2297 = vld [vmem:[%s3 + $0x14] sm:$0xf]
        %v2298 = vld [vmem:[%s3 + $0x18] sm:$0xf]
        %v2299 = vld [vmem:[%s3 + $0x1c] sm:$0xf]
        %v2300 = vld [vmem:[%s3 + $0x20] sm:$0xf]
        %v2301 = vld [vmem:[%s3 + $0x24] sm:$0xf]
        %v2302 = vld [vmem:[%s3 + $0x28] sm:$0xf]
        %v2303 = vld [vmem:[%s3 + $0x2c] sm:$0xf]
        %v2304 = vld [vmem:[%s3 + $0x30] sm:$0xf]
        %v2305 = vld [vmem:[%s3 + $0x34] sm:$0xf]
        %v2306 = vld [vmem:[%s3 + $0x38] sm:$0xf]
        %v2307 = vld [vmem:[%s3 + $0x3c] sm:$0xf]
        %v2308 = vld [vmem:[%s3 + $0x40] sm:$0xf]
        %v2309 = vld [vmem:[%s3 + $0x44] sm:$0xf]
        %v2310 = vld [vmem:[%s4] sm:$0x1]
        %v2312 = vlaneseq
        %v2313 = vshrl.u32 %v2312, 7
        %v2314 = vsub.s32 0, %v2313
        %v2315 = vrot.slane %v2310, %v2314
        %v2335 = vunpack.c.l.b16 %v2292
        %v2336 = vunpack.c.l.b16 %v2293
        %v2337 = vunpack.c.l.b16 %v2294
        %v2338 = vunpack.c.l.b16 %v2295
        %v2339 = vunpack.c.l.b16 %v2296
        %v2340 = vunpack.c.l.b16 %v2297
        %v2341 = vunpack.c.l.b16 %v2298
        %v2342 = vunpack.c.l.b16 %v2299
        %v2343 = vunpack.c.l.b16 %v2300
        %v2344 = vunpack.c.l.b16 %v2301
        %v2345 = vunpack.c.l.b16 %v2302
        %v2346 = vunpack.c.l.b16 %v2303
        %v2347 = vunpack.c.l.b16 %v2304
        %v2348 = vunpack.c.l.b16 %v2305
        %v2349 = vunpack.c.l.b16 %v2306
        %v2350 = vunpack.c.l.b16 %v2307
        %v2351 = vunpack.c.l.b16 %v2308
        %v2352 = vunpack.c.l.b16 %v2309
        %v2353 = vpack.c.b16 %v2336, %v2335
        %v2354 = vpack.c.b16 %v2338, %v2337
        %v2355 = vpack.c.b16 %v2340, %v2339
        %v2356 = vpack.c.b16 %v2342, %v2341
        %v2357 = vpack.c.b16 %v2344, %v2343
        %v2358 = vpack.c.b16 %v2346, %v2345
        %v2359 = vpack.c.b16 %v2348, %v2347
        %v2360 = vpack.c.b16 %v2350, %v2349
        %v2361 = vpack.c.b16 %v2352, %v2351
        %v2372 = vsel %vm627, %v2261, 0
        %v2375 = vsel %vm627, %v2263, 0
        %v2378 = vsel %vm627, %v2265, 0
        %v2381 = vsel %vm627, %v2267, 0
        %v2384 = vsel %vm627, %v2269, 0
        %v2387 = vsel %vm627, %v2271, 0
        %v2390 = vsel %vm627, %v2273, 0
        %v2393 = vsel %vm627, %v2275, 0
        %v2396 = vsel %vm627, %v2277, 0
        %v2399 = vsel %vm627, %v2279, 0
        %v2402 = vsel %vm627, %v2281, 0
        %v2405 = vsel %vm627, %v2283, 0
        %v2408 = vsel %vm627, %v2285, 0
        %v2411 = vsel %vm627, %v2287, 0
        %v2414 = vsel %vm627, %v2289, 0
        %v2417 = vsel %vm627, %v2291, 0
        %2419 = vmatprep.subr.bf16.mxu0 0
        %2420 = vmatpush1.bf16.msra.mxu0 %v2353
        %2421 = vmatprep.subr.bf16.mxu0 0
        %2422 = vmatpush1.bf16.msra.mxu0 %v2354
        %2423 = vmatprep.subr.bf16.mxu0 0
        %2424 = vmatpush1.bf16.msra.mxu0 %v2355
        %2425 = vmatprep.subr.bf16.mxu0 0
        %2426 = vmatpush1.bf16.msra.mxu0 %v2356
        %2427 = vmatprep.subr.bf16.mxu0 0
        %2428 = vmatpush1.bf16.msra.mxu0 %v2357
        %2429 = vmatprep.subr.bf16.mxu0 0
        %2430 = vmatpush1.bf16.msra.mxu0 %v2358
        %2431 = vmatprep.subr.bf16.mxu0 0
        %2432 = vmatpush1.bf16.msra.mxu0 %v2359
        %2433 = vmatprep.subr.bf16.mxu0 0
        %2434 = vmatpush1.bf16.msra.mxu0 %v2360
        %2435 = vmatprep.subr.bf16.mxu0 0
        %2436 = vmatpush1.bf16.msra.mxu0 %v2361
        %2437 = vmatprep.subr.bf16.mxu0 0
        %2438 = vmatpush1.bf16.msra.mxu0 0
        %2439 = vmatprep.subr.bf16.mxu0 0
        %2440 = vmatpush1.bf16.msra.mxu0 0
        %2441 = vmatprep.subr.bf16.mxu0 0
        %2442 = vmatpush1.bf16.msra.mxu0 0
        %2443 = vmatprep.subr.bf16.mxu0 0
        %2444 = vmatpush1.bf16.msra.mxu0 0
        %2445 = vmatprep.subr.bf16.mxu0 0
        %2446 = vmatpush1.bf16.msra.mxu0 0
        %2447 = vmatprep.subr.bf16.mxu0 0
        %2448 = vmatpush1.bf16.msra.mxu0 0
        %2449 = vmatprep.subr.bf16.mxu0 0
        %2450 = vmatpush1.bf16.msra.mxu0 0
        %2451 = vmatprep.mubr.bf16.mxu0 %v2372
        %2452 = vmatmul.mubr.bf16.gmra.mrb[0].mxu0 %v2260
        %v2453 = vpop.f32.mrb[0].mxu0
        %v2454 = vadd.f32 %v2315, %v2453
        %v2455 = vpop.f32.mrb[0].mxu0
        %v2456 = vpop.f32.mrb[0].mxu0
        %v2457 = vadd.f32 %v2315, %v2456
        %v2458 = vpop.f32.mrb[0].mxu0
        %2459 = vmatprep.mubr.bf16.mxu0 %v2375
        %2460 = vmatmul.mubr.bf16.gmra.mrb[0].mxu0 %v2262
        %v2461 = vpop.f32.mrb[0].mxu0
        %v2462 = vadd.f32 %v2315, %v2461
        %v2463 = vpop.f32.mrb[0].mxu0
        %v2464 = vpop.f32.mrb[0].mxu0
        %v2465 = vadd.f32 %v2315, %v2464
        %v2466 = vpop.f32.mrb[0].mxu0
        %2467 = vmatprep.mubr.bf16.mxu0 %v2378
        %2468 = vmatmul.mubr.bf16.gmra.mrb[0].mxu0 %v2264
        %v2469 = vpop.f32.mrb[0].mxu0
        %v2470 = vadd.f32 %v2315, %v2469
        %v2471 = vpop.f32.mrb[0].mxu0
        %v2472 = vpop.f32.mrb[0].mxu0
        %v2473 = vadd.f32 %v2315, %v2472
        %v2474 = vpop.f32.mrb[0].mxu0
        %2475 = vmatprep.mubr.bf16.mxu0 %v2381
        %2476 = vmatmul.mubr.bf16.gmra.mrb[0].mxu0 %v2266
        %v2477 = vpop.f32.mrb[0].mxu0
        %v2478 = vadd.f32 %v2315, %v2477
        %v2479 = vpop.f32.mrb[0].mxu0
        %v2480 = vpop.f32.mrb[0].mxu0
        %v2481 = vadd.f32 %v2315, %v2480
        %v2482 = vpop.f32.mrb[0].mxu0
        %2483 = vmatprep.mubr.bf16.mxu0 %v2384
        %2484 = vmatmul.mubr.bf16.gmra.mrb[0].mxu0 %v2268
        %v2485 = vpop.f32.mrb[0].mxu0
        %v2486 = vadd.f32 %v2315, %v2485
        %v2487 = vpop.f32.mrb[0].mxu0
        %v2488 = vpop.f32.mrb[0].mxu0
        %v2489 = vadd.f32 %v2315, %v2488
        %v2490 = vpop.f32.mrb[0].mxu0
        %2491 = vmatprep.mubr.bf16.mxu0 %v2387
        %2492 = vmatmul.mubr.bf16.gmra.mrb[0].mxu0 %v2270
        %v2493 = vpop.f32.mrb[0].mxu0
        %v2494 = vadd.f32 %v2315, %v2493
        %v2495 = vpop.f32.mrb[0].mxu0
        %v2496 = vpop.f32.mrb[0].mxu0
        %v2497 = vadd.f32 %v2315, %v2496
        %v2498 = vpop.f32.mrb[0].mxu0
        %2499 = vmatprep.mubr.bf16.mxu0 %v2390
        %2500 = vmatmul.mubr.bf16.gmra.mrb[0].mxu0 %v2272
        %v2501 = vpop.f32.mrb[0].mxu0
        %v2502 = vadd.f32 %v2315, %v2501
        %v2503 = vpop.f32.mrb[0].mxu0
        %v2504 = vpop.f32.mrb[0].mxu0
        %v2505 = vadd.f32 %v2315, %v2504
        %v2506 = vpop.f32.mrb[0].mxu0
        %2507 = vmatprep.mubr.bf16.mxu0 %v2393
        %2508 = vmatmul.mubr.bf16.gmra.mrb[0].mxu0 %v2274
        %v2509 = vpop.f32.mrb[0].mxu0
        %v2510 = vadd.f32 %v2315, %v2509
        %v2511 = vpop.f32.mrb[0].mxu0
        %v2512 = vpop.f32.mrb[0].mxu0
        %v2513 = vadd.f32 %v2315, %v2512
        %v2514 = vpop.f32.mrb[0].mxu0
        %2515 = vmatprep.mubr.bf16.mxu0 %v2396
        %2516 = vmatmul.mubr.bf16.gmra.mrb[0].mxu0 %v2276
        %v2517 = vpop.f32.mrb[0].mxu0
        %v2518 = vadd.f32 %v2315, %v2517
        %v2519 = vpop.f32.mrb[0].mxu0
        %v2520 = vpop.f32.mrb[0].mxu0
        %v2521 = vadd.f32 %v2315, %v2520
        %v2522 = vpop.f32.mrb[0].mxu0
        %2523 = vmatprep.mubr.bf16.mxu0 %v2399
        %2524 = vmatmul.mubr.bf16.gmra.mrb[0].mxu0 %v2278
        %v2525 = vpop.f32.mrb[0].mxu0
        %v2526 = vadd.f32 %v2315, %v2525
        %v2527 = vpop.f32.mrb[0].mxu0
        %v2528 = vpop.f32.mrb[0].mxu0
        %v2529 = vadd.f32 %v2315, %v2528
        %v2530 = vpop.f32.mrb[0].mxu0
        %2531 = vmatprep.mubr.bf16.mxu0 %v2402
        %2532 = vmatmul.mubr.bf16.gmra.mrb[0].mxu0 %v2280
        %v2533 = vpop.f32.mrb[0].mxu0
        %v2534 = vadd.f32 %v2315, %v2533
        %v2535 = vpop.f32.mrb[0].mxu0
        %v2536 = vpop.f32.mrb[0].mxu0
        %v2537 = vadd.f32 %v2315, %v2536
        %v2538 = vpop.f32.mrb[0].mxu0
        %2539 = vmatprep.mubr.bf16.mxu0 %v2405
        %2540 = vmatmul.mubr.bf16.gmra.mrb[0].mxu0 %v2282
        %v2541 = vpop.f32.mrb[0].mxu0
        %v2542 = vadd.f32 %v2315, %v2541
        %v2543 = vpop.f32.mrb[0].mxu0
        %v2544 = vpop.f32.mrb[0].mxu0
        %v2545 = vadd.f32 %v2315, %v2544
        %v2546 = vpop.f32.mrb[0].mxu0
        %2547 = vmatprep.mubr.bf16.mxu0 %v2408
        %2548 = vmatmul.mubr.bf16.gmra.mrb[0].mxu0 %v2284
        %v2549 = vpop.f32.mrb[0].mxu0
        %v2550 = vadd.f32 %v2315, %v2549
        %v2551 = vpop.f32.mrb[0].mxu0
        %v2552 = vpop.f32.mrb[0].mxu0
        %v2553 = vadd.f32 %v2315, %v2552
        %v2554 = vpop.f32.mrb[0].mxu0
        %2555 = vmatprep.mubr.bf16.mxu0 %v2411
        %2556 = vmatmul.mubr.bf16.gmra.mrb[0].mxu0 %v2286
        %v2557 = vpop.f32.mrb[0].mxu0
        %v2558 = vadd.f32 %v2315, %v2557
        %v2559 = vpop.f32.mrb[0].mxu0
        %v2560 = vpop.f32.mrb[0].mxu0
        %v2561 = vadd.f32 %v2315, %v2560
        %v2562 = vpop.f32.mrb[0].mxu0
        %2563 = vmatprep.mubr.bf16.mxu0 %v2414
        %2564 = vmatmul.mubr.bf16.gmra.mrb[0].mxu0 %v2288
        %v2565 = vpop.f32.mrb[0].mxu0
        %v2566 = vadd.f32 %v2315, %v2565
        %v2567 = vpop.f32.mrb[0].mxu0
        %v2568 = vpop.f32.mrb[0].mxu0
        %v2569 = vadd.f32 %v2315, %v2568
        %v2570 = vpop.f32.mrb[0].mxu0
        %2571 = vmatprep.mubr.bf16.mxu0 %v2417
        %2572 = vmatmul.mubr.bf16.gmra.mrb[0].mxu0 %v2290
        %v2573 = vpop.f32.mrb[0].mxu0
        %v2574 = vadd.f32 %v2315, %v2573
        %v2575 = vpop.f32.mrb[0].mxu0
        %v2576 = vpop.f32.mrb[0].mxu0
        %v2577 = vadd.f32 %v2315, %v2576
        %v2578 = vpop.f32.mrb[0].mxu0
        %2579 = vdwg.mxu0
        %v2580 = vmax.f32 %v2454, 0.0
        %v2581 = vmax.f32 %v2457, 0.0
        %v2582 = vmax.f32 %v2462, 0.0
        %v2583 = vmax.f32 %v2465, 0.0
        %v2584 = vmax.f32 %v2470, 0.0
        %v2585 = vmax.f32 %v2473, 0.0
        %v2586 = vmax.f32 %v2478, 0.0
        %v2587 = vmax.f32 %v2481, 0.0
        %v2588 = vmax.f32 %v2486, 0.0
        %v2589 = vmax.f32 %v2489, 0.0
        %v2590 = vmax.f32 %v2494, 0.0
        %v2591 = vmax.f32 %v2497, 0.0
        %v2592 = vmax.f32 %v2502, 0.0
        %v2593 = vmax.f32 %v2505, 0.0
        %v2594 = vmax.f32 %v2510, 0.0
        %v2595 = vmax.f32 %v2513, 0.0
        %v2596 = vmax.f32 %v2518, 0.0
        %v2597 = vmax.f32 %v2521, 0.0
        %v2598 = vmax.f32 %v2526, 0.0
        %v2599 = vmax.f32 %v2529, 0.0
        %v2600 = vmax.f32 %v2534, 0.0
        %v2601 = vmax.f32 %v2537, 0.0
        %v2602 = vmax.f32 %v2542, 0.0
        %v2603 = vmax.f32 %v2545, 0.0
        %v2604 = vmax.f32 %v2550, 0.0
        %v2605 = vmax.f32 %v2553, 0.0
        %v2606 = vmax.f32 %v2558, 0.0
        %v2607 = vmax.f32 %v2561, 0.0
        %v2608 = vmax.f32 %v2566, 0.0
        %v2609 = vmax.f32 %v2569, 0.0
        %v2610 = vmax.f32 %v2574, 0.0
        %v2611 = vmax.f32 %v2577, 0.0
        %v2612 = vpack.c.bf16 %v2581, %v2580
        %v2613 = vpack.c.bf16 %v2583, %v2582
        %v2614 = vpack.c.bf16 %v2585, %v2584
        %v2615 = vpack.c.bf16 %v2587, %v2586
        %v2616 = vpack.c.bf16 %v2589, %v2588
        %v2617 = vpack.c.bf16 %v2591, %v2590
        %v2618 = vpack.c.bf16 %v2593, %v2592
        %v2619 = vpack.c.bf16 %v2595, %v2594
        %v2620 = vpack.c.bf16 %v2597, %v2596
        %v2621 = vpack.c.bf16 %v2599, %v2598
        %v2622 = vpack.c.bf16 %v2601, %v2600
        %v2623 = vpack.c.bf16 %v2603, %v2602
        %v2624 = vpack.c.bf16 %v2605, %v2604
        %v2625 = vpack.c.bf16 %v2607, %v2606
        %v2626 = vpack.c.bf16 %v2609, %v2608
        %v2627 = vpack.c.bf16 %v2611, %v2610
        %v2628 = vld [vmem:[%s5] sm:$0xf]
        %v2629 = vld [vmem:[%s5 + $0x4] sm:$0xf]
        %v2630 = vld [vmem:[%s6] sm:$0x1]
        %v2632 = vlaneseq
        %v2633 = vshrl.u32 %v2632, 7
        %v2634 = vsub.s32 0, %v2633
        %v2635 = vrot.slane %v2630, %v2634
        %v2639 = vunpack.c.l.b16 %v2628
        %v2640 = vunpack.c.l.b16 %v2629
        %v2641 = vpack.c.b16 %v2640, %v2639
        %v2644 = vsel %vm627, %v2612, 0
        %v2647 = vsel %vm627, %v2613, 0
        %v2650 = vsel %vm627, %v2614, 0
        %v2653 = vsel %vm627, %v2615, 0
        %v2656 = vsel %vm627, %v2616, 0
        %v2659 = vsel %vm627, %v2617, 0
        %v2662 = vsel %vm627, %v2618, 0
        %v2665 = vsel %vm627, %v2619, 0
        %v2668 = vsel %vm627, %v2620, 0
        %v2671 = vsel %vm627, %v2621, 0
        %v2674 = vsel %vm627, %v2622, 0
        %v2677 = vsel %vm627, %v2623, 0
        %v2680 = vsel %vm627, %v2624, 0
        %v2683 = vsel %vm627, %v2625, 0
        %v2686 = vsel %vm627, %v2626, 0
        %v2689 = vsel %vm627, %v2627, 0
        %2691 = vmatprep.subr.bf16.mxu0 0
        %2692 = vmatpush1.bf16.msra.mxu0 %v2641
        %2693 = vmatprep.subr.bf16.mxu0 0
        %2694 = vmatpush1.bf16.msra.mxu0 0
        %2695 = vmatprep.subr.bf16.mxu0 0
        %2696 = vmatpush1.bf16.msra.mxu0 0
        %2697 = vmatprep.subr.bf16.mxu0 0
        %2698 = vmatpush1.bf16.msra.mxu0 0
        %2699 = vmatprep.subr.bf16.mxu0 0
        %2700 = vmatpush1.bf16.msra.mxu0 0
        %2701 = vmatprep.subr.bf16.mxu0 0
        %2702 = vmatpush1.bf16.msra.mxu0 0
        %2703 = vmatprep.subr.bf16.mxu0 0
        %2704 = vmatpush1.bf16.msra.mxu0 0
        %2705 = vmatprep.subr.bf16.mxu0 0
        %2706 = vmatpush1.bf16.msra.mxu0 0
        %2707 = vmatprep.subr.bf16.mxu0 0
        %2708 = vmatpush1.bf16.msra.mxu0 0
        %2709 = vmatprep.subr.bf16.mxu0 0
        %2710 = vmatpush1.bf16.msra.mxu0 0
        %2711 = vmatprep.subr.bf16.mxu0 0
        %2712 = vmatpush1.bf16.msra.mxu0 0
        %2713 = vmatprep.subr.bf16.mxu0 0
        %2714 = vmatpush1.bf16.msra.mxu0 0
        %2715 = vmatprep.subr.bf16.mxu0 0
        %2716 = vmatpush1.bf16.msra.mxu0 0
        %2717 = vmatprep.subr.bf16.mxu0 0
        %2718 = vmatpush1.bf16.msra.mxu0 0
        %2719 = vmatprep.subr.bf16.mxu0 0
        %2720 = vmatpush1.bf16.msra.mxu0 0
        %2721 = vmatprep.subr.bf16.mxu0 0
        %2722 = vmatpush1.bf16.msra.mxu0 0
        %2723 = vmatprep.mubr.bf16.mxu0 0
        %2724 = vmatmul.mubr.bf16.gmra.mrb[0].mxu0 %v2644
        %v2725 = vpop.f32.mrb[0].mxu0
        %v2726 = vadd.f32 %v2635, %v2725
        %v2727 = vpop.f32.mrb[0].mxu0
        %v2728 = vpop.f32.mrb[0].mxu0
        %v2729 = vadd.f32 %v2635, %v2728
        %v2730 = vpop.f32.mrb[0].mxu0
        %2731 = vmatprep.mubr.bf16.mxu0 0
        %2732 = vmatmul.mubr.bf16.gmra.mrb[0].mxu0 %v2647
        %v2733 = vpop.f32.mrb[0].mxu0
        %v2734 = vadd.f32 %v2635, %v2733
        %v2735 = vpop.f32.mrb[0].mxu0
        %v2736 = vpop.f32.mrb[0].mxu0
        %v2737 = vadd.f32 %v2635, %v2736
        %v2738 = vpop.f32.mrb[0].mxu0
        %2739 = vmatprep.mubr.bf16.mxu0 0
        %2740 = vmatmul.mubr.bf16.gmra.mrb[0].mxu0 %v2650
        %v2741 = vpop.f32.mrb[0].mxu0
        %v2742 = vadd.f32 %v2635, %v2741
        %v2743 = vpop.f32.mrb[0].mxu0
        %v2744 = vpop.f32.mrb[0].mxu0
        %v2745 = vadd.f32 %v2635, %v2744
        %v2746 = vpop.f32.mrb[0].mxu0
        %2747 = vmatprep.mubr.bf16.mxu0 0
        %2748 = vmatmul.mubr.bf16.gmra.mrb[0].mxu0 %v2653
        %v2749 = vpop.f32.mrb[0].mxu0
        %v2750 = vadd.f32 %v2635, %v2749
        %v2751 = vpop.f32.mrb[0].mxu0
        %v2752 = vpop.f32.mrb[0].mxu0
        %v2753 = vadd.f32 %v2635, %v2752
        %v2754 = vpop.f32.mrb[0].mxu0
        %2755 = vmatprep.mubr.bf16.mxu0 0
        %2756 = vmatmul.mubr.bf16.gmra.mrb[0].mxu0 %v2656
        %v2757 = vpop.f32.mrb[0].mxu0
        %v2758 = vadd.f32 %v2635, %v2757
        %v2759 = vpop.f32.mrb[0].mxu0
        %v2760 = vpop.f32.mrb[0].mxu0
        %v2761 = vadd.f32 %v2635, %v2760
        %v2762 = vpop.f32.mrb[0].mxu0
        %2763 = vmatprep.mubr.bf16.mxu0 0
        %2764 = vmatmul.mubr.bf16.gmra.mrb[0].mxu0 %v2659
        %v2765 = vpop.f32.mrb[0].mxu0
        %v2766 = vadd.f32 %v2635, %v2765
        %v2767 = vpop.f32.mrb[0].mxu0
        %v2768 = vpop.f32.mrb[0].mxu0
        %v2769 = vadd.f32 %v2635, %v2768
        %v2770 = vpop.f32.mrb[0].mxu0
        %2771 = vmatprep.mubr.bf16.mxu0 0
        %2772 = vmatmul.mubr.bf16.gmra.mrb[0].mxu0 %v2662
        %v2773 = vpop.f32.mrb[0].mxu0
        %v2774 = vadd.f32 %v2635, %v2773
        %v2775 = vpop.f32.mrb[0].mxu0
        %v2776 = vpop.f32.mrb[0].mxu0
        %v2777 = vadd.f32 %v2635, %v2776
        %v2778 = vpop.f32.mrb[0].mxu0
        %2779 = vmatprep.mubr.bf16.mxu0 0
        %2780 = vmatmul.mubr.bf16.gmra.mrb[0].mxu0 %v2665
        %v2781 = vpop.f32.mrb[0].mxu0
        %v2782 = vadd.f32 %v2635, %v2781
        %v2783 = vpop.f32.mrb[0].mxu0
        %v2784 = vpop.f32.mrb[0].mxu0
        %v2785 = vadd.f32 %v2635, %v2784
        %v2786 = vpop.f32.mrb[0].mxu0
        %2787 = vmatprep.mubr.bf16.mxu0 0
        %2788 = vmatmul.mubr.bf16.gmra.mrb[0].mxu0 %v2668
        %v2789 = vpop.f32.mrb[0].mxu0
        %v2790 = vadd.f32 %v2635, %v2789
        %v2791 = vpop.f32.mrb[0].mxu0
        %v2792 = vpop.f32.mrb[0].mxu0
        %v2793 = vadd.f32 %v2635, %v2792
        %v2794 = vpop.f32.mrb[0].mxu0
        %2795 = vmatprep.mubr.bf16.mxu0 0
        %2796 = vmatmul.mubr.bf16.gmra.mrb[0].mxu0 %v2671
        %v2797 = vpop.f32.mrb[0].mxu0
        %v2798 = vadd.f32 %v2635, %v2797
        %v2799 = vpop.f32.mrb[0].mxu0
        %v2800 = vpop.f32.mrb[0].mxu0
        %v2801 = vadd.f32 %v2635, %v2800
        %v2802 = vpop.f32.mrb[0].mxu0
        %2803 = vmatprep.mubr.bf16.mxu0 0
        %2804 = vmatmul.mubr.bf16.gmra.mrb[0].mxu0 %v2674
        %v2805 = vpop.f32.mrb[0].mxu0
        %v2806 = vadd.f32 %v2635, %v2805
        %v2807 = vpop.f32.mrb[0].mxu0
        %v2808 = vpop.f32.mrb[0].mxu0
        %v2809 = vadd.f32 %v2635, %v2808
        %v2810 = vpop.f32.mrb[0].mxu0
        %2811 = vmatprep.mubr.bf16.mxu0 0
        %2812 = vmatmul.mubr.bf16.gmra.mrb[0].mxu0 %v2677
        %v2813 = vpop.f32.mrb[0].mxu0
        %v2814 = vadd.f32 %v2635, %v2813
        %v2815 = vpop.f32.mrb[0].mxu0
        %v2816 = vpop.f32.mrb[0].mxu0
        %v2817 = vadd.f32 %v2635, %v2816
        %v2818 = vpop.f32.mrb[0].mxu0
        %2819 = vmatprep.mubr.bf16.mxu0 0
        %2820 = vmatmul.mubr.bf16.gmra.mrb[0].mxu0 %v2680
        %v2821 = vpop.f32.mrb[0].mxu0
        %v2822 = vadd.f32 %v2635, %v2821
        %v2823 = vpop.f32.mrb[0].mxu0
        %v2824 = vpop.f32.mrb[0].mxu0
        %v2825 = vadd.f32 %v2635, %v2824
        %v2826 = vpop.f32.mrb[0].mxu0
        %2827 = vmatprep.mubr.bf16.mxu0 0
        %2828 = vmatmul.mubr.bf16.gmra.mrb[0].mxu0 %v2683
        %v2829 = vpop.f32.mrb[0].mxu0
        %v2830 = vadd.f32 %v2635, %v2829
        %v2831 = vpop.f32.mrb[0].mxu0
        %v2832 = vpop.f32.mrb[0].mxu0
        %v2833 = vadd.f32 %v2635, %v2832
        %v2834 = vpop.f32.mrb[0].mxu0
        %2835 = vmatprep.mubr.bf16.mxu0 0
        %2836 = vmatmul.mubr.bf16.gmra.mrb[0].mxu0 %v2686
        %v2837 = vpop.f32.mrb[0].mxu0
        %v2838 = vadd.f32 %v2635, %v2837
        %v2839 = vpop.f32.mrb[0].mxu0
        %v2840 = vpop.f32.mrb[0].mxu0
        %v2841 = vadd.f32 %v2635, %v2840
        %v2842 = vpop.f32.mrb[0].mxu0
        %2843 = vmatprep.mubr.bf16.mxu0 0
        %2844 = vmatmul.mubr.bf16.gmra.mrb[0].mxu0 %v2689
        %v2845 = vpop.f32.mrb[0].mxu0
        %v2846 = vadd.f32 %v2635, %v2845
        %v2847 = vpop.f32.mrb[0].mxu0
        %v2848 = vpop.f32.mrb[0].mxu0
        %v2849 = vadd.f32 %v2635, %v2848
        %v2850 = vpop.f32.mrb[0].mxu0
        %2851 = vdwg.mxu0
        %v2852 = vadd.f32 %v2726, %v298
        %v2853 = vadd.f32 %v2729, %v299
        %v2854 = vadd.f32 %v2734, %v300
        %v2855 = vadd.f32 %v2737, %v301
        %v2856 = vadd.f32 %v2742, %v302
        %v2857 = vadd.f32 %v2745, %v303
        %v2858 = vadd.f32 %v2750, %v304
        %v2859 = vadd.f32 %v2753, %v305
        %v2860 = vadd.f32 %v2758, %v306
        %v2861 = vadd.f32 %v2761, %v307
        %v2862 = vadd.f32 %v2766, %v308
        %v2863 = vadd.f32 %v2769, %v309
        %v2864 = vadd.f32 %v2774, %v310
        %v2865 = vadd.f32 %v2777, %v311
        %v2866 = vadd.f32 %v2782, %v312
        %v2867 = vadd.f32 %v2785, %v313
        %v2868 = vadd.f32 %v2790, %v314
        %v2869 = vadd.f32 %v2793, %v315
        %v2870 = vadd.f32 %v2798, %v316
        %v2871 = vadd.f32 %v2801, %v317
        %v2872 = vadd.f32 %v2806, %v318
        %v2873 = vadd.f32 %v2809, %v319
        %v2874 = vadd.f32 %v2814, %v320
        %v2875 = vadd.f32 %v2817, %v321
        %v2876 = vadd.f32 %v2822, %v322
        %v2877 = vadd.f32 %v2825, %v323
        %v2878 = vadd.f32 %v2830, %v324
        %v2879 = vadd.f32 %v2833, %v325
        %v2880 = vadd.f32 %v2838, %v326
        %v2881 = vadd.f32 %v2841, %v327
        %v2882 = vadd.f32 %v2846, %v328
        %v2883 = vadd.f32 %v2849, %v329
        %v2884 = vmax.f32 %v2852, 0.0
        %v2885 = vmax.f32 %v2853, 0.0
        %v2886 = vmax.f32 %v2854, 0.0
        %v2887 = vmax.f32 %v2855, 0.0
        %v2888 = vmax.f32 %v2856, 0.0
        %v2889 = vmax.f32 %v2857, 0.0
        %v2890 = vmax.f32 %v2858, 0.0
        %v2891 = vmax.f32 %v2859, 0.0
        %v2892 = vmax.f32 %v2860, 0.0
        %v2893 = vmax.f32 %v2861, 0.0
        %v2894 = vmax.f32 %v2862, 0.0
        %v2895 = vmax.f32 %v2863, 0.0
        %v2896 = vmax.f32 %v2864, 0.0
        %v2897 = vmax.f32 %v2865, 0.0
        %v2898 = vmax.f32 %v2866, 0.0
        %v2899 = vmax.f32 %v2867, 0.0
        %v2900 = vmax.f32 %v2868, 0.0
        %v2901 = vmax.f32 %v2869, 0.0
        %v2902 = vmax.f32 %v2870, 0.0
        %v2903 = vmax.f32 %v2871, 0.0
        %v2904 = vmax.f32 %v2872, 0.0
        %v2905 = vmax.f32 %v2873, 0.0
        %v2906 = vmax.f32 %v2874, 0.0
        %v2907 = vmax.f32 %v2875, 0.0
        %v2908 = vmax.f32 %v2876, 0.0
        %v2909 = vmax.f32 %v2877, 0.0
        %v2910 = vmax.f32 %v2878, 0.0
        %v2911 = vmax.f32 %v2879, 0.0
        %v2912 = vmax.f32 %v2880, 0.0
        %v2913 = vmax.f32 %v2881, 0.0
        %v2914 = vmax.f32 %v2882, 0.0
        %v2915 = vmax.f32 %v2883, 0.0
        %2916 = vst.msk [vmem:[%s296] sm:$0xff] %vm385, %v2884
        %2917 = vst.msk [vmem:[%s296 + $0x8] sm:$0xff] %vm385, %v2885
        %2918 = vst.msk [vmem:[%s296 + $0x10] sm:$0xff] %vm385, %v2886
        %2919 = vst.msk [vmem:[%s296 + $0x18] sm:$0xff] %vm385, %v2887
        %2920 = vst.msk [vmem:[%s296 + $0x20] sm:$0xff] %vm385, %v2888
        %2921 = vst.msk [vmem:[%s296 + $0x28] sm:$0xff] %vm385, %v2889
        %2922 = vst.msk [vmem:[%s296 + $0x30] sm:$0xff] %vm385, %v2890
        %2923 = vst.msk [vmem:[%s296 + $0x38] sm:$0xff] %vm385, %v2891
        %2924 = vst.msk [vmem:[%s296 + $0x40] sm:$0xff] %vm385, %v2892
        %2925 = vst.msk [vmem:[%s296 + $0x48] sm:$0xff] %vm385, %v2893
        %2926 = vst.msk [vmem:[%s296 + $0x50] sm:$0xff] %vm385, %v2894
        %2927 = vst.msk [vmem:[%s296 + $0x58] sm:$0xff] %vm385, %v2895
        %2928 = vst.msk [vmem:[%s296 + $0x60] sm:$0xff] %vm385, %v2896
        %2929 = vst.msk [vmem:[%s296 + $0x68] sm:$0xff] %vm385, %v2897
        %2930 = vst.msk [vmem:[%s296 + $0x70] sm:$0xff] %vm385, %v2898
        %2931 = vst.msk [vmem:[%s296 + $0x78] sm:$0xff] %vm385, %v2899
        %2932 = vst.msk [vmem:[%s296 + $0x80] sm:$0xff] %vm385, %v2900
        %2933 = vst.msk [vmem:[%s296 + $0x88] sm:$0xff] %vm385, %v2901
        %2934 = vst.msk [vmem:[%s296 + $0x90] sm:$0xff] %vm385, %v2902
        %2935 = vst.msk [vmem:[%s296 + $0x98] sm:$0xff] %vm385, %v2903
        %2936 = vst.msk [vmem:[%s296 + $0xa0] sm:$0xff] %vm385, %v2904
        %2937 = vst.msk [vmem:[%s296 + $0xa8] sm:$0xff] %vm385, %v2905
        %2938 = vst.msk [vmem:[%s296 + $0xb0] sm:$0xff] %vm385, %v2906
        %2939 = vst.msk [vmem:[%s296 + $0xb8] sm:$0xff] %vm385, %v2907
        %2940 = vst.msk [vmem:[%s296 + $0xc0] sm:$0xff] %vm385, %v2908
        %2941 = vst.msk [vmem:[%s296 + $0xc8] sm:$0xff] %vm385, %v2909
        %2942 = vst.msk [vmem:[%s296 + $0xd0] sm:$0xff] %vm385, %v2910
        %2943 = vst.msk [vmem:[%s296 + $0xd8] sm:$0xff] %vm385, %v2911
        %2944 = vst.msk [vmem:[%s296 + $0xe0] sm:$0xff] %vm385, %v2912
        %2945 = vst.msk [vmem:[%s296 + $0xe8] sm:$0xff] %vm385, %v2913
        %2946 = vst.msk [vmem:[%s296 + $0xf0] sm:$0xff] %vm385, %v2914
        %2947 = vst.msk [vmem:[%s296 + $0xf8] sm:$0xff] %vm385, %v2915
        %s2948 = sand.u32 %s184, 1
        %s2949 = scalar_lea.sflag [#allocation5], %s2948
        %s2950 = sand.u32 %s184, 1
        %s2951 = smul.addr %s2950, 256
        %s2952 = scalar_lea.vmem [#allocation6], %s2951
        // Predicated region
        $region53: #{bottleneck_forward.1} parent=47 // pred_check
          %p2953 = pneg %p194
        $region54: #{bottleneck_forward.1} parent=47 // pred_check_branch
          %2955 = sbr.rel (%p2953) target = $region56
        $region55: #{bottleneck_forward.1} parent=47 // pred_region
          %s2957 = ssub.s32 4096, 4096
          %2958 = vsyncadd %s2949, %s2957
          %s2959 = smul.addr %s24, 32
          %s2960 = smul.addr %s2959, 128
          %s2961 = scalar_lea.hbm %s7, %s2960
          %s2962 = sshll.u32 %s2952, 4
          %s2963 = int_to_ptr.vmem [resolvable:$true] %s2962
          %2968 = dma.vmem_to_hbm [thread:$0]  %s2963, 4096, %s2961, %s2949, 128, 128, 8
        $region56: #{bottleneck_forward.1} parent=47 // pred_fallthru
          _
      $region48: #{bottleneck_forward.1} parent=5 // pred_fallthru
        _
      %p2969 = scmp.le.s32.totalorder 2, %s19
      // Predicated region
      $region57: #{bottleneck_forward.1} parent=5 // pred_check
        %p2970 = pneg %p2969
      $region58: #{bottleneck_forward.1} parent=5 // pred_check_branch
        %2972 = sbr.rel (%p2970) target = $region60
      $region59: #{bottleneck_forward.1} parent=5 // pred_region
        %s2973 = ssub.s32 %s19, 2
        // Predicated region
        $region61: #{bottleneck_forward.1} parent=59 // pred_check
          %p2974 = pneg %p200
        $region62: #{bottleneck_forward.1} parent=59 // pred_check_branch
          %2976 = sbr.rel (%p2974) target = $region64
        $region63: #{bottleneck_forward.1} parent=59 // pred_region
          %s2977 = sand.u32 %s185, 1
          %s2978 = scalar_lea.sflag [#allocation5], %s2977
          %s2979 = sand.u32 %s185, 1
          %s2980 = smul.addr %s2979, 256
          %s2981 = scalar_lea.vmem [#allocation6], %s2980
          %2982 = dma.done %s2978, 4096
        $region64: #{bottleneck_forward.1} parent=59 // pred_fallthru
          _
      $region60: #{bottleneck_forward.1} parent=5 // pred_fallthru
        _
    $region6: #{bottleneck_forward.1} parent=1 // loop_footer
      %s23 = sadd.s32 1, %s19
    $region7: #{bottleneck_forward.1} parent=1 // loop_footer_branch
      %18 = sbr.rel target = $region3
    $region8: #{bottleneck_forward.1} parent=1 // loop_exit
      _
    %2983 = vsyncpa [#allocation4], 1
    %s2984 = scalar_lea.sflag [#allocation4], 1
    %2985 = vsyncpa %s2984, 1
    %2986 = vsyncpa [#allocation5], 1
    %s2987 = scalar_lea.sflag [#allocation5], 1
    %2988 = vsyncpa %s2987, 1

</llo_original>
